<compile_context>
chip_gen: v7x
topology: tpu7x:2x2x1
jax: 0.10.0
libtpu: 0.0.40
codegen_flags: <defaults>
</compile_context>

<pallas_src>
import functools

import jax
import jax.numpy as jnp
from jax.experimental import pallas as pl
from jax.experimental.pallas import tpu as pltpu

# x @ W with W already stored as (D_in, D_out): contract x's last dim with W's first.
_DN_XW = (((1,), (0,)), ((), ()))
# x @ y^T without materializing the transpose: contract last dims of both.
_DN_XYT = (((1,), (1,)), ((), ()))
_PREC = jax.lax.Precision.HIGHEST  # full-f32 MXU contraction


def _round_up(x, m):
    return (x + m - 1) // m * m


def _nodevec(e, w, b, alpha):
    # tanh(alpha * (e @ W + b)); W is (D_in, D_out), b is (1, D_out).
    h = jax.lax.dot_general(e, w, _DN_XW, precision=_PREC,
                            preferred_element_type=jnp.float32)
    return jnp.tanh(alpha * (h + b))


def _score(x, y):
    # x @ y^T on the MXU (no transpose materialized).
    return jax.lax.dot_general(x, y, _DN_XYT, precision=_PREC,
                               preferred_element_type=jnp.float32)


def _gl_kernel_full(emb1_ref, emb2_ref, w1_ref, b1_ref, w2_ref, b2_ref,
                    out_ref, *, alpha):
    """Gridless small-N path: whole problem in VMEM, true size."""
    nv1 = _nodevec(emb1_ref[...], w1_ref[...], b1_ref[...], alpha)
    nv2 = _nodevec(emb2_ref[...], w2_ref[...], b2_ref[...], alpha)
    a = _score(nv1, nv2) - _score(nv2, nv1)
    out_ref[...] = jnp.maximum(jnp.tanh(alpha * a), 0.0)


def _gl_kernel_tiled(e1r_ref, e2r_ref, e1c_ref, e2c_ref,
                     w1_ref, b1_ref, w2_ref, b2_ref, out_ref, *, alpha):
    """Output-tiled large-N path: tile (i, j) of the (N, N) score matrix.

    Nodevecs for the tile's row block and column block are recomputed locally
    (cheap: K = D is small); only the N x N output is gridded.
    """
    nv1_r = _nodevec(e1r_ref[...], w1_ref[...], b1_ref[...], alpha)
    nv2_r = _nodevec(e2r_ref[...], w2_ref[...], b2_ref[...], alpha)
    nv1_c = _nodevec(e1c_ref[...], w1_ref[...], b1_ref[...], alpha)
    nv2_c = _nodevec(e2c_ref[...], w2_ref[...], b2_ref[...], alpha)
    a = _score(nv1_r, nv2_c) - _score(nv2_r, nv1_c)
    out_ref[...] = jnp.maximum(jnp.tanh(alpha * a), 0.0)


@functools.partial(jax.jit, static_argnames=("alpha", "tile"))
def mtgnn_graph_learning(emb1, emb2, w1, b1, w2, b2, *, alpha, tile=512):
    n, d = emb1.shape
    alpha = float(alpha)

    # PyTorch Linear weight is (out, in); pre-transpose to (in, out) at trace
    # time so the kernel dots contract the weight's leading dim (native MXU RHS
    # layout, no in-kernel weight transpose).
    e1 = emb1.astype(jnp.float32)
    e2 = emb2.astype(jnp.float32)
    w1t = jnp.transpose(w1).astype(jnp.float32)
    w2t = jnp.transpose(w2).astype(jnp.float32)
    b1r = b1.reshape(1, d).astype(jnp.float32)
    b2r = b2.reshape(1, d).astype(jnp.float32)

    if n <= tile:
        # --- small path: gridless, true-size (no node-axis padding) ---
        cost = pl.CostEstimate(
            flops=2 * (2 * n * d * d) + 2 * (2 * n * n * d) + 6 * n * d + 4 * n * n,
            transcendentals=2 * n * d + n * n,
            bytes_accessed=(2 * n * d + 2 * d * d + 2 * d + n * n) * 4,
        )
        return pl.pallas_call(
            functools.partial(_gl_kernel_full, alpha=alpha),
            out_shape=jax.ShapeDtypeStruct((n, n), jnp.float32),
            in_specs=[pl.BlockSpec(memory_space=pltpu.MemorySpace.VMEM)] * 6,
            out_specs=pl.BlockSpec(memory_space=pltpu.MemorySpace.VMEM),
            cost_estimate=cost,
        )(e1, e2, w1t, b1r, w2t, b2r)

    # --- large path: output tiled, two parallel grid axes ---
    # Pad the node axis to a tile multiple.  Padded rows of the nodevecs are
    # tanh(alpha*b) (nonzero), but they only touch output rows/cols >= n, which
    # are sliced off below; nothing consumes the padded region.
    n_pad = _round_up(n, tile)
    pad = n_pad - n
    e1p = jnp.pad(e1, ((0, pad), (0, 0)))
    e2p = jnp.pad(e2, ((0, pad), (0, 0)))

    grid = (n_pad // tile, n_pad // tile)
    row_spec = pl.BlockSpec((tile, d), lambda i, j: (i, 0))
    col_spec = pl.BlockSpec((tile, d), lambda i, j: (j, 0))
    w_spec = pl.BlockSpec((d, d), lambda i, j: (0, 0))
    b_spec = pl.BlockSpec((1, d), lambda i, j: (0, 0))

    out_pad = pl.pallas_call(
        functools.partial(_gl_kernel_tiled, alpha=alpha),
        out_shape=jax.ShapeDtypeStruct((n_pad, n_pad), jnp.float32),
        grid=grid,
        in_specs=[row_spec, row_spec, col_spec, col_spec,
                  w_spec, b_spec, w_spec, b_spec],
        out_specs=pl.BlockSpec((tile, tile), lambda i, j: (i, j)),
        compiler_params=pltpu.CompilerParams(
            dimension_semantics=("parallel", "parallel")),
    )(e1p, e2p, e1p, e2p, w1t, b1r, w2t, b2r)
    return out_pad[:n, :n]


# ----------------------------------------------------------------------------
# Reference + init helpers (test harness)
# ----------------------------------------------------------------------------

def _xavier_uniform(key, shape, dtype=jnp.float32):
    # PyTorch xavier_uniform_ for 2-D: fan_in = shape[1], fan_out = shape[0]
    fan_out, fan_in = shape
    bound = (6.0 / (fan_in + fan_out)) ** 0.5
    return jax.random.uniform(key, shape, dtype, minval=-bound, maxval=bound)


def _reference_f32(emb1, emb2, w1, b1, w2, b2, alpha):
    """Pure-JAX f32 reference of the PyTorch forward (non-Gumbel path)."""
    nv1 = jnp.tanh(alpha * (jnp.dot(emb1, w1.T, precision=_PREC) + b1))
    nv2 = jnp.tanh(alpha * (jnp.dot(emb2, w2.T, precision=_PREC) + b2))
    a = (jnp.dot(nv1, nv2.T, precision=_PREC)
         - jnp.dot(nv2, nv1.T, precision=_PREC))
    return jnp.maximum(jnp.tanh(alpha * a), 0.0)


def _make_params(key, num_nodes, hidden_dim):
    k_e1, k_e2, k_w1, k_b1, k_w2, k_b2 = jax.random.split(key, 6)
    # Mimics _reset_parameters(): dim > 1 -> xavier_uniform_, dim == 1 -> uniform_(0, 1)
    emb1 = _xavier_uniform(k_e1, (num_nodes, hidden_dim))      # Embedding 1 weight
    emb2 = _xavier_uniform(k_e2, (num_nodes, hidden_dim))      # Embedding 2 weight
    w1 = _xavier_uniform(k_w1, (hidden_dim, hidden_dim))       # Linear 1 weight (out, in)
    b1 = jax.random.uniform(k_b1, (hidden_dim,), jnp.float32)  # Linear 1 bias
    w2 = _xavier_uniform(k_w2, (hidden_dim, hidden_dim))       # Linear 2 weight (out, in)
    b2 = jax.random.uniform(k_b2, (hidden_dim,), jnp.float32)  # Linear 2 bias
    return emb1, emb2, w1, b1, w2, b2


if __name__ == "__main__":
    alpha = 3.0  # config.graph_learning.alpha (MTGNN default)
    key = jax.random.PRNGKey(0)
    k_small, k_big = jax.random.split(key)

    # --- default small config: N=16 nodes, D=32 hidden (gridless path) ---
    num_nodes, hidden_dim = 16, 32
    params = _make_params(k_small, num_nodes, hidden_dim)

    out = mtgnn_graph_learning(*params, alpha=alpha)
    out = jax.block_until_ready(out)
    assert out.shape == (num_nodes, num_nodes)

    ref = _reference_f32(*params, alpha)
    err = float(jnp.max(jnp.abs(out - ref)))
    assert jnp.allclose(out, ref, atol=2e-2, rtol=1e-2), f"small-path max err {err}"

    # --- larger config exercising the tiled path (N not a tile multiple) ---
    n_big, d_big = 300, 64
    params_big = _make_params(k_big, n_big, d_big)

    out_big = mtgnn_graph_learning(*params_big, alpha=alpha, tile=256)
    out_big = jax.block_until_ready(out_big)
    assert out_big.shape == (n_big, n_big)

    ref_big = _reference_f32(*params_big, alpha)
    err_big = float(jnp.max(jnp.abs(out_big - ref_big)))
    assert jnp.allclose(out_big, ref_big, atol=2e-2, rtol=1e-2), \
        f"tiled-path max err {err_big}"

    print("KERNEL_OK")
</pallas_src>

<mosaic_0001>
module attributes {stable_mosaic.version = 11 : i64} {
  func.func @_gl_kernel_full(%arg0: memref<16x32xf32, #tpu.memory_space<vmem>>, %arg1: memref<16x32xf32, #tpu.memory_space<vmem>>, %arg2: memref<32x32xf32, #tpu.memory_space<vmem>>, %arg3: memref<1x32xf32, #tpu.memory_space<vmem>>, %arg4: memref<32x32xf32, #tpu.memory_space<vmem>>, %arg5: memref<1x32xf32, #tpu.memory_space<vmem>>, %arg6: memref<16x16xf32, #tpu.memory_space<vmem>>) attributes {dimension_semantics = [], scalar_prefetch = 0 : i64, scratch_operands = 0 : i64, tpu.core_type = #tpu.core_type<tc>} {
    %c0 = arith.constant 0 : index
    %c0_0 = arith.constant 0 : index
    %0 = vector.load %arg0[%c0, %c0_0] : memref<16x32xf32, #tpu.memory_space<vmem>>, vector<16x32xf32>
    %c0_1 = arith.constant 0 : index
    %c0_2 = arith.constant 0 : index
    %1 = vector.load %arg2[%c0_1, %c0_2] : memref<32x32xf32, #tpu.memory_space<vmem>>, vector<32x32xf32>
    %c0_3 = arith.constant 0 : index
    %c0_4 = arith.constant 0 : index
    %2 = vector.load %arg3[%c0_3, %c0_4] : memref<1x32xf32, #tpu.memory_space<vmem>>, vector<1x32xf32>
    %cst = arith.constant dense<0.000000e+00> : vector<16x32xf32>
    %3 = tpu.matmul %0, %1, %cst {dimension_numbers = #tpu.dot_dimension_numbers<[1], [0], [0], [1], [0, 0, 1, 1], [], []>, precision = #tpu.contract_precision<fp32>} : vector<16x32xf32>, vector<32x32xf32>, vector<16x32xf32> -> vector<16x32xf32>
    %4 = vector.broadcast %2 : vector<1x32xf32> to vector<16x32xf32>
    %5 = arith.addf %3, %4 : vector<16x32xf32>
    %cst_5 = arith.constant 3.000000e+00 : f32
    %6 = vector.broadcast %cst_5 : f32 to vector<16x32xf32>
    %7 = arith.mulf %6, %5 : vector<16x32xf32>
    %8 = math.tanh %7 : vector<16x32xf32>
    %c0_6 = arith.constant 0 : index
    %c0_7 = arith.constant 0 : index
    %9 = vector.load %arg1[%c0_6, %c0_7] : memref<16x32xf32, #tpu.memory_space<vmem>>, vector<16x32xf32>
    %c0_8 = arith.constant 0 : index
    %c0_9 = arith.constant 0 : index
    %10 = vector.load %arg4[%c0_8, %c0_9] : memref<32x32xf32, #tpu.memory_space<vmem>>, vector<32x32xf32>
    %c0_10 = arith.constant 0 : index
    %c0_11 = arith.constant 0 : index
    %11 = vector.load %arg5[%c0_10, %c0_11] : memref<1x32xf32, #tpu.memory_space<vmem>>, vector<1x32xf32>
    %cst_12 = arith.constant dense<0.000000e+00> : vector<16x32xf32>
    %12 = tpu.matmul %9, %10, %cst_12 {dimension_numbers = #tpu.dot_dimension_numbers<[1], [0], [0], [1], [0, 0, 1, 1], [], []>, precision = #tpu.contract_precision<fp32>} : vector<16x32xf32>, vector<32x32xf32>, vector<16x32xf32> -> vector<16x32xf32>
    %13 = vector.broadcast %11 : vector<1x32xf32> to vector<16x32xf32>
    %14 = arith.addf %12, %13 : vector<16x32xf32>
    %cst_13 = arith.constant 3.000000e+00 : f32
    %15 = vector.broadcast %cst_13 : f32 to vector<16x32xf32>
    %16 = arith.mulf %15, %14 : vector<16x32xf32>
    %17 = math.tanh %16 : vector<16x32xf32>
    %cst_14 = arith.constant dense<0.000000e+00> : vector<16x16xf32>
    %18 = tpu.matmul %8, %17, %cst_14 {dimension_numbers = #tpu.dot_dimension_numbers<[1], [1], [0], [0], [0, 0, 1, 0], [], []>, precision = #tpu.contract_precision<fp32>} : vector<16x32xf32>, vector<16x32xf32>, vector<16x16xf32> -> vector<16x16xf32>
    %cst_15 = arith.constant dense<0.000000e+00> : vector<16x16xf32>
    %19 = tpu.matmul %17, %8, %cst_15 {dimension_numbers = #tpu.dot_dimension_numbers<[1], [1], [0], [0], [0, 0, 1, 0], [], []>, precision = #tpu.contract_precision<fp32>} : vector<16x32xf32>, vector<16x32xf32>, vector<16x16xf32> -> vector<16x16xf32>
    %20 = arith.subf %18, %19 : vector<16x16xf32>
    %cst_16 = arith.constant 3.000000e+00 : f32
    %21 = vector.broadcast %cst_16 : f32 to vector<16x16xf32>
    %22 = arith.mulf %21, %20 : vector<16x16xf32>
    %23 = math.tanh %22 : vector<16x16xf32>
    %cst_17 = arith.constant 0.000000e+00 : f32
    %24 = vector.broadcast %cst_17 : f32 to vector<16x16xf32>
    %25 = arith.maximumf %23, %24 : vector<16x16xf32>
    %c0_18 = arith.constant 0 : index
    %c0_19 = arith.constant 0 : index
    %26 = vector.load %arg6[%c0_18, %c0_19] : memref<16x16xf32, #tpu.memory_space<vmem>>, vector<16x16xf32>
    tpu.vector_store %arg6[%c0_18, %c0_19], %25 {strides = array<i32>} : memref<16x16xf32, #tpu.memory_space<vmem>>, vector<16x16xf32>,
    return
  }
}

</mosaic_0001>

<llo_original>
// kernel: mtgnn_graph_learning.1
$region0: #{mtgnn_graph_learning.1}
  #allocation0 [shape = 'u32[]', space=smem, size = 0x4, offset = 0x4, fixed_abs, tag = 'smem constant byte address 0x4 - core index']
  #allocation1 [shape = 'u32[144,128]{1,0:T(1,128)}', space=vmem, size = 0x12000, scoped, tag = 'internal scratch']
  %s0 = inlined_call_operand.vmem [shape: f32[16,32], index: 0, kind: input, shape index: {}]
  %s1 = inlined_call_operand.vmem [shape: f32[16,32], index: 1, kind: input, shape index: {}]
  %s2 = inlined_call_operand.vmem [shape: f32[32,32], index: 2, kind: input, shape index: {}]
  %s3 = inlined_call_operand.vmem [shape: f32[1,32], index: 3, kind: input, shape index: {}]
  %s4 = inlined_call_operand.vmem [shape: f32[32,32], index: 4, kind: input, shape index: {}]
  %s5 = inlined_call_operand.vmem [shape: f32[1,32], index: 5, kind: input, shape index: {}]
  %s6 = inlined_call_operand.hbm [shape: f32[16,16], index: 6, kind: output, shape index: {}]
  %s7 = sld [smem:[#allocation0]]
  $region34: #{mtgnn_graph_learning.1} parent=0
    _
  %s9 = ssub.s32 1, %s7
  %s10 = scalar_select 0, %s9, %s7
  $region1: #{mtgnn_graph_learning.1} parent=0
    #allocation2 [shape = 'u8[8192]{0}', space=vmem, size = 0x2000, scoped, tag = 'output window, operand 0, single buffered']
    #allocation3 [shape = 's32[1]{0}', space=sflag, size = 0x4, scoped, tag = 'scoped memory for mtgnn_graph_learning.1']
    %11 = vsyncpa [#allocation3], 0
    // Predicated region
    $region2: #{mtgnn_graph_learning.1} parent=1 // pred_check
      _
    $region3: #{mtgnn_graph_learning.1} parent=1 // pred_check_branch
      %13 = sbr.rel (0) target = $region5
    $region4: #{mtgnn_graph_learning.1} parent=1 // pred_region
      _
    $region5: #{mtgnn_graph_learning.1} parent=1 // pred_fallthru
      _
    // Predicated region
    $region6: #{mtgnn_graph_learning.1} parent=1 // pred_check
      _
    $region7: #{mtgnn_graph_learning.1} parent=1 // pred_check_branch
      %15 = sbr.rel (0) target = $region9
    $region8: #{mtgnn_graph_learning.1} parent=1 // pred_region
      _
    $region9: #{mtgnn_graph_learning.1} parent=1 // pred_fallthru
      _
    // Predicated region
    $region10: #{mtgnn_graph_learning.1} parent=1 // pred_check
      _
    $region11: #{mtgnn_graph_learning.1} parent=1 // pred_check_branch
      %17 = sbr.rel (0) target = $region13
    $region12: #{mtgnn_graph_learning.1} parent=1 // pred_region
      _
    $region13: #{mtgnn_graph_learning.1} parent=1 // pred_fallthru
      _
    // Predicated region
    $region14: #{mtgnn_graph_learning.1} parent=1 // pred_check
      _
    $region15: #{mtgnn_graph_learning.1} parent=1 // pred_check_branch
      %19 = sbr.rel (0) target = $region17
    $region16: #{mtgnn_graph_learning.1} parent=1 // pred_region
      _
    $region17: #{mtgnn_graph_learning.1} parent=1 // pred_fallthru
      _
    // Predicated region
    $region18: #{mtgnn_graph_learning.1} parent=1 // pred_check
      _
    $region19: #{mtgnn_graph_learning.1} parent=1 // pred_check_branch
      %21 = sbr.rel (0) target = $region21
    $region20: #{mtgnn_graph_learning.1} parent=1 // pred_region
      _
    $region21: #{mtgnn_graph_learning.1} parent=1 // pred_fallthru
      _
    // Predicated region
    $region22: #{mtgnn_graph_learning.1} parent=1 // pred_check
      _
    $region23: #{mtgnn_graph_learning.1} parent=1 // pred_check_branch
      %23 = sbr.rel (0) target = $region25
    $region24: #{mtgnn_graph_learning.1} parent=1 // pred_region
      _
    $region25: #{mtgnn_graph_learning.1} parent=1 // pred_fallthru
      _
    %v24 = vld [vmem:[%s0] sm:$0xff]
    %v25 = vld [vmem:[%s0 + $0x8] sm:$0xff]
    %v26 = vld [vmem:[%s2] sm:$0xff]
    %v27 = vld [vmem:[%s2 + $0x8] sm:$0xff]
    %v28 = vld [vmem:[%s2 + $0x10] sm:$0xff]
    %v29 = vld [vmem:[%s2 + $0x18] sm:$0xff]
    %v30 = vld [vmem:[%s3] sm:$0x1]
    %v32 = vlaneseq
    %v33 = vshrl.u32 %v32, 7
    %v34 = vsub.s32 0, %v33
    %v35 = vrot.slane %v30, %v34
    %vm37 = vcmask 261120
    %v39 = vsel %vm37, %v24, 0
    %v42 = vsel %vm37, %v25, 0
    %44 = vmatprep.subr.mxu0 0.0
    %v45 = vand.u32 %v26, 4294901760
    %46 = vmatpush1.msra.mxu0 %v45
    %47 = vmatprep.subr.mxu0 0.0
    %v48 = vand.u32 %v27, 4294901760
    %49 = vmatpush1.msra.mxu0 %v48
    %50 = vmatprep.subr.mxu0 0.0
    %v51 = vand.u32 %v28, 4294901760
    %52 = vmatpush1.msra.mxu0 %v51
    %53 = vmatprep.subr.mxu0 0.0
    %v54 = vand.u32 %v29, 4294901760
    %55 = vmatpush1.msra.mxu0 %v54
    %56 = vmatprep.subr.mxu0 0.0
    %57 = vmatpush1.msra.mxu0 0.0
    %58 = vmatprep.subr.mxu0 0.0
    %59 = vmatpush1.msra.mxu0 0.0
    %60 = vmatprep.subr.mxu0 0.0
    %61 = vmatpush1.msra.mxu0 0.0
    %62 = vmatprep.subr.mxu0 0.0
    %63 = vmatpush1.msra.mxu0 0.0
    %64 = vmatprep.subr.mxu0 0.0
    %65 = vmatpush1.msra.mxu0 0.0
    %66 = vmatprep.subr.mxu0 0.0
    %67 = vmatpush1.msra.mxu0 0.0
    %68 = vmatprep.subr.mxu0 0.0
    %69 = vmatpush1.msra.mxu0 0.0
    %70 = vmatprep.subr.mxu0 0.0
    %71 = vmatpush1.msra.mxu0 0.0
    %72 = vmatprep.subr.mxu0 0.0
    %73 = vmatpush1.msra.mxu0 0.0
    %74 = vmatprep.subr.mxu0 0.0
    %75 = vmatpush1.msra.mxu0 0.0
    %76 = vmatprep.subr.mxu0 0.0
    %77 = vmatpush1.msra.mxu0 0.0
    %78 = vmatprep.subr.mxu0 0.0
    %79 = vmatpush1.msra.mxu0 0.0
    %80 = vmatprep.subr.mxu0 0.0
    %81 = vmatpush1.msra.mxu0 0.0
    %82 = vmatprep.subr.mxu0 0.0
    %83 = vmatpush1.msra.mxu0 0.0
    %84 = vmatprep.subr.mxu0 0.0
    %85 = vmatpush1.msra.mxu0 0.0
    %86 = vmatprep.subr.mxu0 0.0
    %87 = vmatpush1.msra.mxu0 0.0
    %88 = vmatprep.subr.mxu0 0.0
    %89 = vmatpush1.msra.mxu0 0.0
    %90 = vmatprep.subr.mxu0 0.0
    %91 = vmatpush1.msra.mxu0 0.0
    %92 = vmatprep.subr.mxu0 0.0
    %93 = vmatpush1.msra.mxu0 0.0
    %94 = vmatprep.subr.mxu0 0.0
    %95 = vmatpush1.msra.mxu0 0.0
    %96 = vmatprep.subr.mxu0 0.0
    %97 = vmatpush1.msra.mxu0 0.0
    %98 = vmatprep.subr.mxu0 0.0
    %99 = vmatpush1.msra.mxu0 0.0
    %100 = vmatprep.subr.mxu0 0.0
    %101 = vmatpush1.msra.mxu0 0.0
    %102 = vmatprep.subr.mxu0 0.0
    %103 = vmatpush1.msra.mxu0 0.0
    %104 = vmatprep.subr.mxu0 0.0
    %105 = vmatpush1.msra.mxu0 0.0
    %106 = vmatprep.subr.mxu0 0.0
    %107 = vmatpush1.msra.mxu0 0.0
    %108 = vmatprep.subr.mxu0 0.0
    %109 = vmatpush1.msra.mxu0 0.0
    %110 = vmatprep.subr.mxu0 0.0
    %111 = vmatpush1.msra.mxu0 0.0
    %112 = vmatprep.mubr.f32.mxu0 0.0
    %v113 = vand.u32 %v39, 4294901760
    %v114 = vsub.f32 %v39, %v113
    %v115 = vand.u32 %v114, 4294901760
    %v116 = vsub.f32 %v114, %v115
    %v117 = vand.u32 %v116, 4294901760
    %118 = vmatmul.mubr.f32.gmra.mrb[0].mxu0 %v117
    %v119 = vpop.f32.mrb[0].mxu0
    %v120 = vadd.f32 %v35, %v119
    %v121 = vpop.f32.mrb[0].mxu0
    %122 = vmatprep.mubr.f32.mxu0 0.0
    %v123 = vand.u32 %v42, 4294901760
    %v124 = vsub.f32 %v42, %v123
    %v125 = vand.u32 %v124, 4294901760
    %v126 = vsub.f32 %v124, %v125
    %v127 = vand.u32 %v126, 4294901760
    %128 = vmatmul.mubr.f32.gmra.mrb[0].mxu0 %v127
    %v129 = vpop.f32.mrb[0].mxu0
    %v130 = vadd.f32 %v35, %v129
    %v131 = vpop.f32.mrb[0].mxu0
    %132 = vdwg.mxu0
    %133 = vmatprep.subr.mxu0 0.0
    %v134 = vand.u32 %v26, 4294901760
    %v135 = vsub.f32 %v26, %v134
    %v136 = vand.u32 %v135, 4294901760
    %v137 = vsub.f32 %v135, %v136
    %v138 = vand.u32 %v137, 4294901760
    %139 = vmatpush1.msra.mxu0 %v138
    %140 = vmatprep.subr.mxu0 0.0
    %v141 = vand.u32 %v27, 4294901760
    %v142 = vsub.f32 %v27, %v141
    %v143 = vand.u32 %v142, 4294901760
    %v144 = vsub.f32 %v142, %v143
    %v145 = vand.u32 %v144, 4294901760
    %146 = vmatpush1.msra.mxu0 %v145
    %147 = vmatprep.subr.mxu0 0.0
    %v148 = vand.u32 %v28, 4294901760
    %v149 = vsub.f32 %v28, %v148
    %v150 = vand.u32 %v149, 4294901760
    %v151 = vsub.f32 %v149, %v150
    %v152 = vand.u32 %v151, 4294901760
    %153 = vmatpush1.msra.mxu0 %v152
    %154 = vmatprep.subr.mxu0 0.0
    %v155 = vand.u32 %v29, 4294901760
    %v156 = vsub.f32 %v29, %v155
    %v157 = vand.u32 %v156, 4294901760
    %v158 = vsub.f32 %v156, %v157
    %v159 = vand.u32 %v158, 4294901760
    %160 = vmatpush1.msra.mxu0 %v159
    %161 = vmatprep.subr.mxu0 0.0
    %162 = vmatpush1.msra.mxu0 0.0
    %163 = vmatprep.subr.mxu0 0.0
    %164 = vmatpush1.msra.mxu0 0.0
    %165 = vmatprep.subr.mxu0 0.0
    %166 = vmatpush1.msra.mxu0 0.0
    %167 = vmatprep.subr.mxu0 0.0
    %168 = vmatpush1.msra.mxu0 0.0
    %169 = vmatprep.subr.mxu0 0.0
    %170 = vmatpush1.msra.mxu0 0.0
    %171 = vmatprep.subr.mxu0 0.0
    %172 = vmatpush1.msra.mxu0 0.0
    %173 = vmatprep.subr.mxu0 0.0
    %174 = vmatpush1.msra.mxu0 0.0
    %175 = vmatprep.subr.mxu0 0.0
    %176 = vmatpush1.msra.mxu0 0.0
    %177 = vmatprep.subr.mxu0 0.0
    %178 = vmatpush1.msra.mxu0 0.0
    %179 = vmatprep.subr.mxu0 0.0
    %180 = vmatpush1.msra.mxu0 0.0
    %181 = vmatprep.subr.mxu0 0.0
    %182 = vmatpush1.msra.mxu0 0.0
    %183 = vmatprep.subr.mxu0 0.0
    %184 = vmatpush1.msra.mxu0 0.0
    %185 = vmatprep.subr.mxu0 0.0
    %186 = vmatpush1.msra.mxu0 0.0
    %187 = vmatprep.subr.mxu0 0.0
    %188 = vmatpush1.msra.mxu0 0.0
    %189 = vmatprep.subr.mxu0 0.0
    %190 = vmatpush1.msra.mxu0 0.0
    %191 = vmatprep.subr.mxu0 0.0
    %192 = vmatpush1.msra.mxu0 0.0
    %193 = vmatprep.subr.mxu0 0.0
    %194 = vmatpush1.msra.mxu0 0.0
    %195 = vmatprep.subr.mxu0 0.0
    %196 = vmatpush1.msra.mxu0 0.0
    %197 = vmatprep.subr.mxu0 0.0
    %198 = vmatpush1.msra.mxu0 0.0
    %199 = vmatprep.subr.mxu0 0.0
    %200 = vmatpush1.msra.mxu0 0.0
    %201 = vmatprep.subr.mxu0 0.0
    %202 = vmatpush1.msra.mxu0 0.0
    %203 = vmatprep.subr.mxu0 0.0
    %204 = vmatpush1.msra.mxu0 0.0
    %205 = vmatprep.subr.mxu0 0.0
    %206 = vmatpush1.msra.mxu0 0.0
    %207 = vmatprep.subr.mxu0 0.0
    %208 = vmatpush1.msra.mxu0 0.0
    %209 = vmatprep.subr.mxu0 0.0
    %210 = vmatpush1.msra.mxu0 0.0
    %211 = vmatprep.subr.mxu0 0.0
    %212 = vmatpush1.msra.mxu0 0.0
    %213 = vmatprep.subr.mxu0 0.0
    %214 = vmatpush1.msra.mxu0 0.0
    %215 = vmatprep.subr.mxu0 0.0
    %216 = vmatpush1.msra.mxu0 0.0
    %217 = vmatprep.mubr.f32.mxu0 0.0
    %v218 = vand.u32 %v39, 4294901760
    %219 = vmatmul.mubr.f32.gmra.mrb[0].mxu0 %v218
    %v220 = vpop.f32.mrb[0].mxu0
    %v221 = vadd.f32 %v120, %v220
    %v222 = vpop.f32.mrb[0].mxu0
    %223 = vmatprep.mubr.f32.mxu0 0.0
    %v224 = vand.u32 %v42, 4294901760
    %225 = vmatmul.mubr.f32.gmra.mrb[0].mxu0 %v224
    %v226 = vpop.f32.mrb[0].mxu0
    %v227 = vadd.f32 %v130, %v226
    %v228 = vpop.f32.mrb[0].mxu0
    %229 = vdwg.mxu0
    %230 = vmatprep.subr.mxu0 0.0
    %v231 = vand.u32 %v26, 4294901760
    %v232 = vsub.f32 %v26, %v231
    %233 = vmatpush1.msra.mxu0 %v232
    %234 = vmatprep.subr.mxu0 0.0
    %v235 = vand.u32 %v27, 4294901760
    %v236 = vsub.f32 %v27, %v235
    %237 = vmatpush1.msra.mxu0 %v236
    %238 = vmatprep.subr.mxu0 0.0
    %v239 = vand.u32 %v28, 4294901760
    %v240 = vsub.f32 %v28, %v239
    %241 = vmatpush1.msra.mxu0 %v240
    %242 = vmatprep.subr.mxu0 0.0
    %v243 = vand.u32 %v29, 4294901760
    %v244 = vsub.f32 %v29, %v243
    %245 = vmatpush1.msra.mxu0 %v244
    %246 = vmatprep.subr.mxu0 0.0
    %247 = vmatpush1.msra.mxu0 0.0
    %248 = vmatprep.subr.mxu0 0.0
    %249 = vmatpush1.msra.mxu0 0.0
    %250 = vmatprep.subr.mxu0 0.0
    %251 = vmatpush1.msra.mxu0 0.0
    %252 = vmatprep.subr.mxu0 0.0
    %253 = vmatpush1.msra.mxu0 0.0
    %254 = vmatprep.subr.mxu0 0.0
    %255 = vmatpush1.msra.mxu0 0.0
    %256 = vmatprep.subr.mxu0 0.0
    %257 = vmatpush1.msra.mxu0 0.0
    %258 = vmatprep.subr.mxu0 0.0
    %259 = vmatpush1.msra.mxu0 0.0
    %260 = vmatprep.subr.mxu0 0.0
    %261 = vmatpush1.msra.mxu0 0.0
    %262 = vmatprep.subr.mxu0 0.0
    %263 = vmatpush1.msra.mxu0 0.0
    %264 = vmatprep.subr.mxu0 0.0
    %265 = vmatpush1.msra.mxu0 0.0
    %266 = vmatprep.subr.mxu0 0.0
    %267 = vmatpush1.msra.mxu0 0.0
    %268 = vmatprep.subr.mxu0 0.0
    %269 = vmatpush1.msra.mxu0 0.0
    %270 = vmatprep.subr.mxu0 0.0
    %271 = vmatpush1.msra.mxu0 0.0
    %272 = vmatprep.subr.mxu0 0.0
    %273 = vmatpush1.msra.mxu0 0.0
    %274 = vmatprep.subr.mxu0 0.0
    %275 = vmatpush1.msra.mxu0 0.0
    %276 = vmatprep.subr.mxu0 0.0
    %277 = vmatpush1.msra.mxu0 0.0
    %278 = vmatprep.subr.mxu0 0.0
    %279 = vmatpush1.msra.mxu0 0.0
    %280 = vmatprep.subr.mxu0 0.0
    %281 = vmatpush1.msra.mxu0 0.0
    %282 = vmatprep.subr.mxu0 0.0
    %283 = vmatpush1.msra.mxu0 0.0
    %284 = vmatprep.subr.mxu0 0.0
    %285 = vmatpush1.msra.mxu0 0.0
    %286 = vmatprep.subr.mxu0 0.0
    %287 = vmatpush1.msra.mxu0 0.0
    %288 = vmatprep.subr.mxu0 0.0
    %289 = vmatpush1.msra.mxu0 0.0
    %290 = vmatprep.subr.mxu0 0.0
    %291 = vmatpush1.msra.mxu0 0.0
    %292 = vmatprep.subr.mxu0 0.0
    %293 = vmatpush1.msra.mxu0 0.0
    %294 = vmatprep.subr.mxu0 0.0
    %295 = vmatpush1.msra.mxu0 0.0
    %296 = vmatprep.subr.mxu0 0.0
    %297 = vmatpush1.msra.mxu0 0.0
    %298 = vmatprep.subr.mxu0 0.0
    %299 = vmatpush1.msra.mxu0 0.0
    %300 = vmatprep.subr.mxu0 0.0
    %301 = vmatpush1.msra.mxu0 0.0
    %302 = vmatprep.mubr.f32.mxu0 0.0
    %v303 = vand.u32 %v39, 4294901760
    %v304 = vsub.f32 %v39, %v303
    %305 = vmatmul.mubr.f32.gmra.mrb[0].mxu0 %v304
    %v306 = vpop.f32.mrb[0].mxu0
    %v307 = vadd.f32 %v221, %v306
    %v308 = vpop.f32.mrb[0].mxu0
    %309 = vmatprep.mubr.f32.mxu0 0.0
    %v310 = vand.u32 %v42, 4294901760
    %v311 = vsub.f32 %v42, %v310
    %312 = vmatmul.mubr.f32.gmra.mrb[0].mxu0 %v311
    %v313 = vpop.f32.mrb[0].mxu0
    %v314 = vadd.f32 %v227, %v313
    %v315 = vpop.f32.mrb[0].mxu0
    %316 = vdwg.mxu0
    %317 = vmatprep.subr.mxu0 0.0
    %v318 = vand.u32 %v26, 4294901760
    %319 = vmatpush1.msra.mxu0 %v318
    %320 = vmatprep.subr.mxu0 0.0
    %v321 = vand.u32 %v27, 4294901760
    %322 = vmatpush1.msra.mxu0 %v321
    %323 = vmatprep.subr.mxu0 0.0
    %v324 = vand.u32 %v28, 4294901760
    %325 = vmatpush1.msra.mxu0 %v324
    %326 = vmatprep.subr.mxu0 0.0
    %v327 = vand.u32 %v29, 4294901760
    %328 = vmatpush1.msra.mxu0 %v327
    %329 = vmatprep.subr.mxu0 0.0
    %330 = vmatpush1.msra.mxu0 0.0
    %331 = vmatprep.subr.mxu0 0.0
    %332 = vmatpush1.msra.mxu0 0.0
    %333 = vmatprep.subr.mxu0 0.0
    %334 = vmatpush1.msra.mxu0 0.0
    %335 = vmatprep.subr.mxu0 0.0
    %336 = vmatpush1.msra.mxu0 0.0
    %337 = vmatprep.subr.mxu0 0.0
    %338 = vmatpush1.msra.mxu0 0.0
    %339 = vmatprep.subr.mxu0 0.0
    %340 = vmatpush1.msra.mxu0 0.0
    %341 = vmatprep.subr.mxu0 0.0
    %342 = vmatpush1.msra.mxu0 0.0
    %343 = vmatprep.subr.mxu0 0.0
    %344 = vmatpush1.msra.mxu0 0.0
    %345 = vmatprep.subr.mxu0 0.0
    %346 = vmatpush1.msra.mxu0 0.0
    %347 = vmatprep.subr.mxu0 0.0
    %348 = vmatpush1.msra.mxu0 0.0
    %349 = vmatprep.subr.mxu0 0.0
    %350 = vmatpush1.msra.mxu0 0.0
    %351 = vmatprep.subr.mxu0 0.0
    %352 = vmatpush1.msra.mxu0 0.0
    %353 = vmatprep.subr.mxu0 0.0
    %354 = vmatpush1.msra.mxu0 0.0
    %355 = vmatprep.subr.mxu0 0.0
    %356 = vmatpush1.msra.mxu0 0.0
    %357 = vmatprep.subr.mxu0 0.0
    %358 = vmatpush1.msra.mxu0 0.0
    %359 = vmatprep.subr.mxu0 0.0
    %360 = vmatpush1.msra.mxu0 0.0
    %361 = vmatprep.subr.mxu0 0.0
    %362 = vmatpush1.msra.mxu0 0.0
    %363 = vmatprep.subr.mxu0 0.0
    %364 = vmatpush1.msra.mxu0 0.0
    %365 = vmatprep.subr.mxu0 0.0
    %366 = vmatpush1.msra.mxu0 0.0
    %367 = vmatprep.subr.mxu0 0.0
    %368 = vmatpush1.msra.mxu0 0.0
    %369 = vmatprep.subr.mxu0 0.0
    %370 = vmatpush1.msra.mxu0 0.0
    %371 = vmatprep.subr.mxu0 0.0
    %372 = vmatpush1.msra.mxu0 0.0
    %373 = vmatprep.subr.mxu0 0.0
    %374 = vmatpush1.msra.mxu0 0.0
    %375 = vmatprep.subr.mxu0 0.0
    %376 = vmatpush1.msra.mxu0 0.0
    %377 = vmatprep.subr.mxu0 0.0
    %378 = vmatpush1.msra.mxu0 0.0
    %379 = vmatprep.subr.mxu0 0.0
    %380 = vmatpush1.msra.mxu0 0.0
    %381 = vmatprep.subr.mxu0 0.0
    %382 = vmatpush1.msra.mxu0 0.0
    %383 = vmatprep.subr.mxu0 0.0
    %384 = vmatpush1.msra.mxu0 0.0
    %385 = vmatprep.mubr.f32.mxu0 0.0
    %v386 = vand.u32 %v39, 4294901760
    %v387 = vsub.f32 %v39, %v386
    %v388 = vand.u32 %v387, 4294901760
    %389 = vmatmul.mubr.f32.gmra.mrb[0].mxu0 %v388
    %v390 = vpop.f32.mrb[0].mxu0
    %v391 = vadd.f32 %v307, %v390
    %v392 = vpop.f32.mrb[0].mxu0
    %393 = vmatprep.mubr.f32.mxu0 0.0
    %v394 = vand.u32 %v42, 4294901760
    %v395 = vsub.f32 %v42, %v394
    %v396 = vand.u32 %v395, 4294901760
    %397 = vmatmul.mubr.f32.gmra.mrb[0].mxu0 %v396
    %v398 = vpop.f32.mrb[0].mxu0
    %v399 = vadd.f32 %v314, %v398
    %v400 = vpop.f32.mrb[0].mxu0
    %401 = vdwg.mxu0
    %402 = vmatprep.subr.mxu0 0.0
    %v403 = vand.u32 %v26, 4294901760
    %v404 = vsub.f32 %v26, %v403
    %v405 = vand.u32 %v404, 4294901760
    %406 = vmatpush1.msra.mxu0 %v405
    %407 = vmatprep.subr.mxu0 0.0
    %v408 = vand.u32 %v27, 4294901760
    %v409 = vsub.f32 %v27, %v408
    %v410 = vand.u32 %v409, 4294901760
    %411 = vmatpush1.msra.mxu0 %v410
    %412 = vmatprep.subr.mxu0 0.0
    %v413 = vand.u32 %v28, 4294901760
    %v414 = vsub.f32 %v28, %v413
    %v415 = vand.u32 %v414, 4294901760
    %416 = vmatpush1.msra.mxu0 %v415
    %417 = vmatprep.subr.mxu0 0.0
    %v418 = vand.u32 %v29, 4294901760
    %v419 = vsub.f32 %v29, %v418
    %v420 = vand.u32 %v419, 4294901760
    %421 = vmatpush1.msra.mxu0 %v420
    %422 = vmatprep.subr.mxu0 0.0
    %423 = vmatpush1.msra.mxu0 0.0
    %424 = vmatprep.subr.mxu0 0.0
    %425 = vmatpush1.msra.mxu0 0.0
    %426 = vmatprep.subr.mxu0 0.0
    %427 = vmatpush1.msra.mxu0 0.0
    %428 = vmatprep.subr.mxu0 0.0
    %429 = vmatpush1.msra.mxu0 0.0
    %430 = vmatprep.subr.mxu0 0.0
    %431 = vmatpush1.msra.mxu0 0.0
    %432 = vmatprep.subr.mxu0 0.0
    %433 = vmatpush1.msra.mxu0 0.0
    %434 = vmatprep.subr.mxu0 0.0
    %435 = vmatpush1.msra.mxu0 0.0
    %436 = vmatprep.subr.mxu0 0.0
    %437 = vmatpush1.msra.mxu0 0.0
    %438 = vmatprep.subr.mxu0 0.0
    %439 = vmatpush1.msra.mxu0 0.0
    %440 = vmatprep.subr.mxu0 0.0
    %441 = vmatpush1.msra.mxu0 0.0
    %442 = vmatprep.subr.mxu0 0.0
    %443 = vmatpush1.msra.mxu0 0.0
    %444 = vmatprep.subr.mxu0 0.0
    %445 = vmatpush1.msra.mxu0 0.0
    %446 = vmatprep.subr.mxu0 0.0
    %447 = vmatpush1.msra.mxu0 0.0
    %448 = vmatprep.subr.mxu0 0.0
    %449 = vmatpush1.msra.mxu0 0.0
    %450 = vmatprep.subr.mxu0 0.0
    %451 = vmatpush1.msra.mxu0 0.0
    %452 = vmatprep.subr.mxu0 0.0
    %453 = vmatpush1.msra.mxu0 0.0
    %454 = vmatprep.subr.mxu0 0.0
    %455 = vmatpush1.msra.mxu0 0.0
    %456 = vmatprep.subr.mxu0 0.0
    %457 = vmatpush1.msra.mxu0 0.0
    %458 = vmatprep.subr.mxu0 0.0
    %459 = vmatpush1.msra.mxu0 0.0
    %460 = vmatprep.subr.mxu0 0.0
    %461 = vmatpush1.msra.mxu0 0.0
    %462 = vmatprep.subr.mxu0 0.0
    %463 = vmatpush1.msra.mxu0 0.0
    %464 = vmatprep.subr.mxu0 0.0
    %465 = vmatpush1.msra.mxu0 0.0
    %466 = vmatprep.subr.mxu0 0.0
    %467 = vmatpush1.msra.mxu0 0.0
    %468 = vmatprep.subr.mxu0 0.0
    %469 = vmatpush1.msra.mxu0 0.0
    %470 = vmatprep.subr.mxu0 0.0
    %471 = vmatpush1.msra.mxu0 0.0
    %472 = vmatprep.subr.mxu0 0.0
    %473 = vmatpush1.msra.mxu0 0.0
    %474 = vmatprep.subr.mxu0 0.0
    %475 = vmatpush1.msra.mxu0 0.0
    %476 = vmatprep.subr.mxu0 0.0
    %477 = vmatpush1.msra.mxu0 0.0
    %478 = vmatprep.mubr.f32.mxu0 0.0
    %v479 = vand.u32 %v39, 4294901760
    %480 = vmatmul.mubr.f32.gmra.mrb[0].mxu0 %v479
    %v481 = vpop.f32.mrb[0].mxu0
    %v482 = vadd.f32 %v391, %v481
    %v483 = vpop.f32.mrb[0].mxu0
    %484 = vmatprep.mubr.f32.mxu0 0.0
    %v485 = vand.u32 %v42, 4294901760
    %486 = vmatmul.mubr.f32.gmra.mrb[0].mxu0 %v485
    %v487 = vpop.f32.mrb[0].mxu0
    %v488 = vadd.f32 %v399, %v487
    %v489 = vpop.f32.mrb[0].mxu0
    %490 = vdwg.mxu0
    %491 = vmatprep.subr.mxu0 0.0
    %v492 = vand.u32 %v26, 4294901760
    %493 = vmatpush1.msra.mxu0 %v492
    %494 = vmatprep.subr.mxu0 0.0
    %v495 = vand.u32 %v27, 4294901760
    %496 = vmatpush1.msra.mxu0 %v495
    %497 = vmatprep.subr.mxu0 0.0
    %v498 = vand.u32 %v28, 4294901760
    %499 = vmatpush1.msra.mxu0 %v498
    %500 = vmatprep.subr.mxu0 0.0
    %v501 = vand.u32 %v29, 4294901760
    %502 = vmatpush1.msra.mxu0 %v501
    %503 = vmatprep.subr.mxu0 0.0
    %504 = vmatpush1.msra.mxu0 0.0
    %505 = vmatprep.subr.mxu0 0.0
    %506 = vmatpush1.msra.mxu0 0.0
    %507 = vmatprep.subr.mxu0 0.0
    %508 = vmatpush1.msra.mxu0 0.0
    %509 = vmatprep.subr.mxu0 0.0
    %510 = vmatpush1.msra.mxu0 0.0
    %511 = vmatprep.subr.mxu0 0.0
    %512 = vmatpush1.msra.mxu0 0.0
    %513 = vmatprep.subr.mxu0 0.0
    %514 = vmatpush1.msra.mxu0 0.0
    %515 = vmatprep.subr.mxu0 0.0
    %516 = vmatpush1.msra.mxu0 0.0
    %517 = vmatprep.subr.mxu0 0.0
    %518 = vmatpush1.msra.mxu0 0.0
    %519 = vmatprep.subr.mxu0 0.0
    %520 = vmatpush1.msra.mxu0 0.0
    %521 = vmatprep.subr.mxu0 0.0
    %522 = vmatpush1.msra.mxu0 0.0
    %523 = vmatprep.subr.mxu0 0.0
    %524 = vmatpush1.msra.mxu0 0.0
    %525 = vmatprep.subr.mxu0 0.0
    %526 = vmatpush1.msra.mxu0 0.0
    %527 = vmatprep.subr.mxu0 0.0
    %528 = vmatpush1.msra.mxu0 0.0
    %529 = vmatprep.subr.mxu0 0.0
    %530 = vmatpush1.msra.mxu0 0.0
    %531 = vmatprep.subr.mxu0 0.0
    %532 = vmatpush1.msra.mxu0 0.0
    %533 = vmatprep.subr.mxu0 0.0
    %534 = vmatpush1.msra.mxu0 0.0
    %535 = vmatprep.subr.mxu0 0.0
    %536 = vmatpush1.msra.mxu0 0.0
    %537 = vmatprep.subr.mxu0 0.0
    %538 = vmatpush1.msra.mxu0 0.0
    %539 = vmatprep.subr.mxu0 0.0
    %540 = vmatpush1.msra.mxu0 0.0
    %541 = vmatprep.subr.mxu0 0.0
    %542 = vmatpush1.msra.mxu0 0.0
    %543 = vmatprep.subr.mxu0 0.0
    %544 = vmatpush1.msra.mxu0 0.0
    %545 = vmatprep.subr.mxu0 0.0
    %546 = vmatpush1.msra.mxu0 0.0
    %547 = vmatprep.subr.mxu0 0.0
    %548 = vmatpush1.msra.mxu0 0.0
    %549 = vmatprep.subr.mxu0 0.0
    %550 = vmatpush1.msra.mxu0 0.0
    %551 = vmatprep.subr.mxu0 0.0
    %552 = vmatpush1.msra.mxu0 0.0
    %553 = vmatprep.subr.mxu0 0.0
    %554 = vmatpush1.msra.mxu0 0.0
    %555 = vmatprep.subr.mxu0 0.0
    %556 = vmatpush1.msra.mxu0 0.0
    %557 = vmatprep.subr.mxu0 0.0
    %558 = vmatpush1.msra.mxu0 0.0
    %559 = vmatprep.mubr.f32.mxu0 0.0
    %v560 = vand.u32 %v39, 4294901760
    %561 = vmatmul.mubr.f32.gmra.mrb[0].mxu0 %v560
    %v562 = vpop.f32.mrb[0].mxu0
    %v563 = vadd.f32 %v482, %v562
    %v564 = vpop.f32.mrb[0].mxu0
    %565 = vmatprep.mubr.f32.mxu0 0.0
    %v566 = vand.u32 %v42, 4294901760
    %567 = vmatmul.mubr.f32.gmra.mrb[0].mxu0 %v566
    %v568 = vpop.f32.mrb[0].mxu0
    %v569 = vadd.f32 %v488, %v568
    %v570 = vpop.f32.mrb[0].mxu0
    %571 = vdwg.mxu0
    %v572 = vmul.f32 %v563, 3.0
    %v573 = vmul.f32 %v569, 3.0
    %v574 = vtanh.pop %v572
    %v575 = vtanh.pop %v573
    %v576 = vld [vmem:[%s1] sm:$0xff]
    %v577 = vld [vmem:[%s1 + $0x8] sm:$0xff]
    %v578 = vld [vmem:[%s4] sm:$0xff]
    %v579 = vld [vmem:[%s4 + $0x8] sm:$0xff]
    %v580 = vld [vmem:[%s4 + $0x10] sm:$0xff]
    %v581 = vld [vmem:[%s4 + $0x18] sm:$0xff]
    %v582 = vld [vmem:[%s5] sm:$0x1]
    %v584 = vlaneseq
    %v585 = vshrl.u32 %v584, 7
    %v586 = vsub.s32 0, %v585
    %v587 = vrot.slane %v582, %v586
    %v590 = vsel %vm37, %v576, 0
    %v593 = vsel %vm37, %v577, 0
    %595 = vmatprep.subr.mxu0 0.0
    %v596 = vand.u32 %v578, 4294901760
    %597 = vmatpush1.msra.mxu0 %v596
    %598 = vmatprep.subr.mxu0 0.0
    %v599 = vand.u32 %v579, 4294901760
    %600 = vmatpush1.msra.mxu0 %v599
    %601 = vmatprep.subr.mxu0 0.0
    %v602 = vand.u32 %v580, 4294901760
    %603 = vmatpush1.msra.mxu0 %v602
    %604 = vmatprep.subr.mxu0 0.0
    %v605 = vand.u32 %v581, 4294901760
    %606 = vmatpush1.msra.mxu0 %v605
    %607 = vmatprep.subr.mxu0 0.0
    %608 = vmatpush1.msra.mxu0 0.0
    %609 = vmatprep.subr.mxu0 0.0
    %610 = vmatpush1.msra.mxu0 0.0
    %611 = vmatprep.subr.mxu0 0.0
    %612 = vmatpush1.msra.mxu0 0.0
    %613 = vmatprep.subr.mxu0 0.0
    %614 = vmatpush1.msra.mxu0 0.0
    %615 = vmatprep.subr.mxu0 0.0
    %616 = vmatpush1.msra.mxu0 0.0
    %617 = vmatprep.subr.mxu0 0.0
    %618 = vmatpush1.msra.mxu0 0.0
    %619 = vmatprep.subr.mxu0 0.0
    %620 = vmatpush1.msra.mxu0 0.0
    %621 = vmatprep.subr.mxu0 0.0
    %622 = vmatpush1.msra.mxu0 0.0
    %623 = vmatprep.subr.mxu0 0.0
    %624 = vmatpush1.msra.mxu0 0.0
    %625 = vmatprep.subr.mxu0 0.0
    %626 = vmatpush1.msra.mxu0 0.0
    %627 = vmatprep.subr.mxu0 0.0
    %628 = vmatpush1.msra.mxu0 0.0
    %629 = vmatprep.subr.mxu0 0.0
    %630 = vmatpush1.msra.mxu0 0.0
    %631 = vmatprep.subr.mxu0 0.0
    %632 = vmatpush1.msra.mxu0 0.0
    %633 = vmatprep.subr.mxu0 0.0
    %634 = vmatpush1.msra.mxu0 0.0
    %635 = vmatprep.subr.mxu0 0.0
    %636 = vmatpush1.msra.mxu0 0.0
    %637 = vmatprep.subr.mxu0 0.0
    %638 = vmatpush1.msra.mxu0 0.0
    %639 = vmatprep.subr.mxu0 0.0
    %640 = vmatpush1.msra.mxu0 0.0
    %641 = vmatprep.subr.mxu0 0.0
    %642 = vmatpush1.msra.mxu0 0.0
    %643 = vmatprep.subr.mxu0 0.0
    %644 = vmatpush1.msra.mxu0 0.0
    %645 = vmatprep.subr.mxu0 0.0
    %646 = vmatpush1.msra.mxu0 0.0
    %647 = vmatprep.subr.mxu0 0.0
    %648 = vmatpush1.msra.mxu0 0.0
    %649 = vmatprep.subr.mxu0 0.0
    %650 = vmatpush1.msra.mxu0 0.0
    %651 = vmatprep.subr.mxu0 0.0
    %652 = vmatpush1.msra.mxu0 0.0
    %653 = vmatprep.subr.mxu0 0.0
    %654 = vmatpush1.msra.mxu0 0.0
    %655 = vmatprep.subr.mxu0 0.0
    %656 = vmatpush1.msra.mxu0 0.0
    %657 = vmatprep.subr.mxu0 0.0
    %658 = vmatpush1.msra.mxu0 0.0
    %659 = vmatprep.subr.mxu0 0.0
    %660 = vmatpush1.msra.mxu0 0.0
    %661 = vmatprep.subr.mxu0 0.0
    %662 = vmatpush1.msra.mxu0 0.0
    %663 = vmatprep.mubr.f32.mxu0 0.0
    %v664 = vand.u32 %v590, 4294901760
    %v665 = vsub.f32 %v590, %v664
    %v666 = vand.u32 %v665, 4294901760
    %v667 = vsub.f32 %v665, %v666
    %v668 = vand.u32 %v667, 4294901760
    %669 = vmatmul.mubr.f32.gmra.mrb[0].mxu0 %v668
    %v670 = vpop.f32.mrb[0].mxu0
    %v671 = vadd.f32 %v587, %v670
    %v672 = vpop.f32.mrb[0].mxu0
    %673 = vmatprep.mubr.f32.mxu0 0.0
    %v674 = vand.u32 %v593, 4294901760
    %v675 = vsub.f32 %v593, %v674
    %v676 = vand.u32 %v675, 4294901760
    %v677 = vsub.f32 %v675, %v676
    %v678 = vand.u32 %v677, 4294901760
    %679 = vmatmul.mubr.f32.gmra.mrb[0].mxu0 %v678
    %v680 = vpop.f32.mrb[0].mxu0
    %v681 = vadd.f32 %v587, %v680
    %v682 = vpop.f32.mrb[0].mxu0
    %683 = vdwg.mxu0
    %684 = vmatprep.subr.mxu0 0.0
    %v685 = vand.u32 %v578, 4294901760
    %v686 = vsub.f32 %v578, %v685
    %v687 = vand.u32 %v686, 4294901760
    %v688 = vsub.f32 %v686, %v687
    %v689 = vand.u32 %v688, 4294901760
    %690 = vmatpush1.msra.mxu0 %v689
    %691 = vmatprep.subr.mxu0 0.0
    %v692 = vand.u32 %v579, 4294901760
    %v693 = vsub.f32 %v579, %v692
    %v694 = vand.u32 %v693, 4294901760
    %v695 = vsub.f32 %v693, %v694
    %v696 = vand.u32 %v695, 4294901760
    %697 = vmatpush1.msra.mxu0 %v696
    %698 = vmatprep.subr.mxu0 0.0
    %v699 = vand.u32 %v580, 4294901760
    %v700 = vsub.f32 %v580, %v699
    %v701 = vand.u32 %v700, 4294901760
    %v702 = vsub.f32 %v700, %v701
    %v703 = vand.u32 %v702, 4294901760
    %704 = vmatpush1.msra.mxu0 %v703
    %705 = vmatprep.subr.mxu0 0.0
    %v706 = vand.u32 %v581, 4294901760
    %v707 = vsub.f32 %v581, %v706
    %v708 = vand.u32 %v707, 4294901760
    %v709 = vsub.f32 %v707, %v708
    %v710 = vand.u32 %v709, 4294901760
    %711 = vmatpush1.msra.mxu0 %v710
    %712 = vmatprep.subr.mxu0 0.0
    %713 = vmatpush1.msra.mxu0 0.0
    %714 = vmatprep.subr.mxu0 0.0
    %715 = vmatpush1.msra.mxu0 0.0
    %716 = vmatprep.subr.mxu0 0.0
    %717 = vmatpush1.msra.mxu0 0.0
    %718 = vmatprep.subr.mxu0 0.0
    %719 = vmatpush1.msra.mxu0 0.0
    %720 = vmatprep.subr.mxu0 0.0
    %721 = vmatpush1.msra.mxu0 0.0
    %722 = vmatprep.subr.mxu0 0.0
    %723 = vmatpush1.msra.mxu0 0.0
    %724 = vmatprep.subr.mxu0 0.0
    %725 = vmatpush1.msra.mxu0 0.0
    %726 = vmatprep.subr.mxu0 0.0
    %727 = vmatpush1.msra.mxu0 0.0
    %728 = vmatprep.subr.mxu0 0.0
    %729 = vmatpush1.msra.mxu0 0.0
    %730 = vmatprep.subr.mxu0 0.0
    %731 = vmatpush1.msra.mxu0 0.0
    %732 = vmatprep.subr.mxu0 0.0
    %733 = vmatpush1.msra.mxu0 0.0
    %734 = vmatprep.subr.mxu0 0.0
    %735 = vmatpush1.msra.mxu0 0.0
    %736 = vmatprep.subr.mxu0 0.0
    %737 = vmatpush1.msra.mxu0 0.0
    %738 = vmatprep.subr.mxu0 0.0
    %739 = vmatpush1.msra.mxu0 0.0
    %740 = vmatprep.subr.mxu0 0.0
    %741 = vmatpush1.msra.mxu0 0.0
    %742 = vmatprep.subr.mxu0 0.0
    %743 = vmatpush1.msra.mxu0 0.0
    %744 = vmatprep.subr.mxu0 0.0
    %745 = vmatpush1.msra.mxu0 0.0
    %746 = vmatprep.subr.mxu0 0.0
    %747 = vmatpush1.msra.mxu0 0.0
    %748 = vmatprep.subr.mxu0 0.0
    %749 = vmatpush1.msra.mxu0 0.0
    %750 = vmatprep.subr.mxu0 0.0
    %751 = vmatpush1.msra.mxu0 0.0
    %752 = vmatprep.subr.mxu0 0.0
    %753 = vmatpush1.msra.mxu0 0.0
    %754 = vmatprep.subr.mxu0 0.0
    %755 = vmatpush1.msra.mxu0 0.0
    %756 = vmatprep.subr.mxu0 0.0
    %757 = vmatpush1.msra.mxu0 0.0
    %758 = vmatprep.subr.mxu0 0.0
    %759 = vmatpush1.msra.mxu0 0.0
    %760 = vmatprep.subr.mxu0 0.0
    %761 = vmatpush1.msra.mxu0 0.0
    %762 = vmatprep.subr.mxu0 0.0
    %763 = vmatpush1.msra.mxu0 0.0
    %764 = vmatprep.subr.mxu0 0.0
    %765 = vmatpush1.msra.mxu0 0.0
    %766 = vmatprep.subr.mxu0 0.0
    %767 = vmatpush1.msra.mxu0 0.0
    %768 = vmatprep.mubr.f32.mxu0 0.0
    %v769 = vand.u32 %v590, 4294901760
    %770 = vmatmul.mubr.f32.gmra.mrb[0].mxu0 %v769
    %v771 = vpop.f32.mrb[0].mxu0
    %v772 = vadd.f32 %v671, %v771
    %v773 = vpop.f32.mrb[0].mxu0
    %774 = vmatprep.mubr.f32.mxu0 0.0
    %v775 = vand.u32 %v593, 4294901760
    %776 = vmatmul.mubr.f32.gmra.mrb[0].mxu0 %v775
    %v777 = vpop.f32.mrb[0].mxu0
    %v778 = vadd.f32 %v681, %v777
    %v779 = vpop.f32.mrb[0].mxu0
    %780 = vdwg.mxu0
    %781 = vmatprep.subr.mxu0 0.0
    %v782 = vand.u32 %v578, 4294901760
    %v783 = vsub.f32 %v578, %v782
    %784 = vmatpush1.msra.mxu0 %v783
    %785 = vmatprep.subr.mxu0 0.0
    %v786 = vand.u32 %v579, 4294901760
    %v787 = vsub.f32 %v579, %v786
    %788 = vmatpush1.msra.mxu0 %v787
    %789 = vmatprep.subr.mxu0 0.0
    %v790 = vand.u32 %v580, 4294901760
    %v791 = vsub.f32 %v580, %v790
    %792 = vmatpush1.msra.mxu0 %v791
    %793 = vmatprep.subr.mxu0 0.0
    %v794 = vand.u32 %v581, 4294901760
    %v795 = vsub.f32 %v581, %v794
    %796 = vmatpush1.msra.mxu0 %v795
    %797 = vmatprep.subr.mxu0 0.0
    %798 = vmatpush1.msra.mxu0 0.0
    %799 = vmatprep.subr.mxu0 0.0
    %800 = vmatpush1.msra.mxu0 0.0
    %801 = vmatprep.subr.mxu0 0.0
    %802 = vmatpush1.msra.mxu0 0.0
    %803 = vmatprep.subr.mxu0 0.0
    %804 = vmatpush1.msra.mxu0 0.0
    %805 = vmatprep.subr.mxu0 0.0
    %806 = vmatpush1.msra.mxu0 0.0
    %807 = vmatprep.subr.mxu0 0.0
    %808 = vmatpush1.msra.mxu0 0.0
    %809 = vmatprep.subr.mxu0 0.0
    %810 = vmatpush1.msra.mxu0 0.0
    %811 = vmatprep.subr.mxu0 0.0
    %812 = vmatpush1.msra.mxu0 0.0
    %813 = vmatprep.subr.mxu0 0.0
    %814 = vmatpush1.msra.mxu0 0.0
    %815 = vmatprep.subr.mxu0 0.0
    %816 = vmatpush1.msra.mxu0 0.0
    %817 = vmatprep.subr.mxu0 0.0
    %818 = vmatpush1.msra.mxu0 0.0
    %819 = vmatprep.subr.mxu0 0.0
    %820 = vmatpush1.msra.mxu0 0.0
    %821 = vmatprep.subr.mxu0 0.0
    %822 = vmatpush1.msra.mxu0 0.0
    %823 = vmatprep.subr.mxu0 0.0
    %824 = vmatpush1.msra.mxu0 0.0
    %825 = vmatprep.subr.mxu0 0.0
    %826 = vmatpush1.msra.mxu0 0.0
    %827 = vmatprep.subr.mxu0 0.0
    %828 = vmatpush1.msra.mxu0 0.0
    %829 = vmatprep.subr.mxu0 0.0
    %830 = vmatpush1.msra.mxu0 0.0
    %831 = vmatprep.subr.mxu0 0.0
    %832 = vmatpush1.msra.mxu0 0.0
    %833 = vmatprep.subr.mxu0 0.0
    %834 = vmatpush1.msra.mxu0 0.0
    %835 = vmatprep.subr.mxu0 0.0
    %836 = vmatpush1.msra.mxu0 0.0
    %837 = vmatprep.subr.mxu0 0.0
    %838 = vmatpush1.msra.mxu0 0.0
    %839 = vmatprep.subr.mxu0 0.0
    %840 = vmatpush1.msra.mxu0 0.0
    %841 = vmatprep.subr.mxu0 0.0
    %842 = vmatpush1.msra.mxu0 0.0
    %843 = vmatprep.subr.mxu0 0.0
    %844 = vmatpush1.msra.mxu0 0.0
    %845 = vmatprep.subr.mxu0 0.0
    %846 = vmatpush1.msra.mxu0 0.0
    %847 = vmatprep.subr.mxu0 0.0
    %848 = vmatpush1.msra.mxu0 0.0
    %849 = vmatprep.subr.mxu0 0.0
    %850 = vmatpush1.msra.mxu0 0.0
    %851 = vmatprep.subr.mxu0 0.0
    %852 = vmatpush1.msra.mxu0 0.0
    %853 = vmatprep.mubr.f32.mxu0 0.0
    %v854 = vand.u32 %v590, 4294901760
    %v855 = vsub.f32 %v590, %v854
    %856 = vmatmul.mubr.f32.gmra.mrb[0].mxu0 %v855
    %v857 = vpop.f32.mrb[0].mxu0
    %v858 = vadd.f32 %v772, %v857
    %v859 = vpop.f32.mrb[0].mxu0
    %860 = vmatprep.mubr.f32.mxu0 0.0
    %v861 = vand.u32 %v593, 4294901760
    %v862 = vsub.f32 %v593, %v861
    %863 = vmatmul.mubr.f32.gmra.mrb[0].mxu0 %v862
    %v864 = vpop.f32.mrb[0].mxu0
    %v865 = vadd.f32 %v778, %v864
    %v866 = vpop.f32.mrb[0].mxu0
    %867 = vdwg.mxu0
    %868 = vmatprep.subr.mxu0 0.0
    %v869 = vand.u32 %v578, 4294901760
    %870 = vmatpush1.msra.mxu0 %v869
    %871 = vmatprep.subr.mxu0 0.0
    %v872 = vand.u32 %v579, 4294901760
    %873 = vmatpush1.msra.mxu0 %v872
    %874 = vmatprep.subr.mxu0 0.0
    %v875 = vand.u32 %v580, 4294901760
    %876 = vmatpush1.msra.mxu0 %v875
    %877 = vmatprep.subr.mxu0 0.0
    %v878 = vand.u32 %v581, 4294901760
    %879 = vmatpush1.msra.mxu0 %v878
    %880 = vmatprep.subr.mxu0 0.0
    %881 = vmatpush1.msra.mxu0 0.0
    %882 = vmatprep.subr.mxu0 0.0
    %883 = vmatpush1.msra.mxu0 0.0
    %884 = vmatprep.subr.mxu0 0.0
    %885 = vmatpush1.msra.mxu0 0.0
    %886 = vmatprep.subr.mxu0 0.0
    %887 = vmatpush1.msra.mxu0 0.0
    %888 = vmatprep.subr.mxu0 0.0
    %889 = vmatpush1.msra.mxu0 0.0
    %890 = vmatprep.subr.mxu0 0.0
    %891 = vmatpush1.msra.mxu0 0.0
    %892 = vmatprep.subr.mxu0 0.0
    %893 = vmatpush1.msra.mxu0 0.0
    %894 = vmatprep.subr.mxu0 0.0
    %895 = vmatpush1.msra.mxu0 0.0
    %896 = vmatprep.subr.mxu0 0.0
    %897 = vmatpush1.msra.mxu0 0.0
    %898 = vmatprep.subr.mxu0 0.0
    %899 = vmatpush1.msra.mxu0 0.0
    %900 = vmatprep.subr.mxu0 0.0
    %901 = vmatpush1.msra.mxu0 0.0
    %902 = vmatprep.subr.mxu0 0.0
    %903 = vmatpush1.msra.mxu0 0.0
    %904 = vmatprep.subr.mxu0 0.0
    %905 = vmatpush1.msra.mxu0 0.0
    %906 = vmatprep.subr.mxu0 0.0
    %907 = vmatpush1.msra.mxu0 0.0
    %908 = vmatprep.subr.mxu0 0.0
    %909 = vmatpush1.msra.mxu0 0.0
    %910 = vmatprep.subr.mxu0 0.0
    %911 = vmatpush1.msra.mxu0 0.0
    %912 = vmatprep.subr.mxu0 0.0
    %913 = vmatpush1.msra.mxu0 0.0
    %914 = vmatprep.subr.mxu0 0.0
    %915 = vmatpush1.msra.mxu0 0.0
    %916 = vmatprep.subr.mxu0 0.0
    %917 = vmatpush1.msra.mxu0 0.0
    %918 = vmatprep.subr.mxu0 0.0
    %919 = vmatpush1.msra.mxu0 0.0
    %920 = vmatprep.subr.mxu0 0.0
    %921 = vmatpush1.msra.mxu0 0.0
    %922 = vmatprep.subr.mxu0 0.0
    %923 = vmatpush1.msra.mxu0 0.0
    %924 = vmatprep.subr.mxu0 0.0
    %925 = vmatpush1.msra.mxu0 0.0
    %926 = vmatprep.subr.mxu0 0.0
    %927 = vmatpush1.msra.mxu0 0.0
    %928 = vmatprep.subr.mxu0 0.0
    %929 = vmatpush1.msra.mxu0 0.0
    %930 = vmatprep.subr.mxu0 0.0
    %931 = vmatpush1.msra.mxu0 0.0
    %932 = vmatprep.subr.mxu0 0.0
    %933 = vmatpush1.msra.mxu0 0.0
    %934 = vmatprep.subr.mxu0 0.0
    %935 = vmatpush1.msra.mxu0 0.0
    %936 = vmatprep.mubr.f32.mxu0 0.0
    %v937 = vand.u32 %v590, 4294901760
    %v938 = vsub.f32 %v590, %v937
    %v939 = vand.u32 %v938, 4294901760
    %940 = vmatmul.mubr.f32.gmra.mrb[0].mxu0 %v939
    %v941 = vpop.f32.mrb[0].mxu0
    %v942 = vadd.f32 %v858, %v941
    %v943 = vpop.f32.mrb[0].mxu0
    %944 = vmatprep.mubr.f32.mxu0 0.0
    %v945 = vand.u32 %v593, 4294901760
    %v946 = vsub.f32 %v593, %v945
    %v947 = vand.u32 %v946, 4294901760
    %948 = vmatmul.mubr.f32.gmra.mrb[0].mxu0 %v947
    %v949 = vpop.f32.mrb[0].mxu0
    %v950 = vadd.f32 %v865, %v949
    %v951 = vpop.f32.mrb[0].mxu0
    %952 = vdwg.mxu0
    %953 = vmatprep.subr.mxu0 0.0
    %v954 = vand.u32 %v578, 4294901760
    %v955 = vsub.f32 %v578, %v954
    %v956 = vand.u32 %v955, 4294901760
    %957 = vmatpush1.msra.mxu0 %v956
    %958 = vmatprep.subr.mxu0 0.0
    %v959 = vand.u32 %v579, 4294901760
    %v960 = vsub.f32 %v579, %v959
    %v961 = vand.u32 %v960, 4294901760
    %962 = vmatpush1.msra.mxu0 %v961
    %963 = vmatprep.subr.mxu0 0.0
    %v964 = vand.u32 %v580, 4294901760
    %v965 = vsub.f32 %v580, %v964
    %v966 = vand.u32 %v965, 4294901760
    %967 = vmatpush1.msra.mxu0 %v966
    %968 = vmatprep.subr.mxu0 0.0
    %v969 = vand.u32 %v581, 4294901760
    %v970 = vsub.f32 %v581, %v969
    %v971 = vand.u32 %v970, 4294901760
    %972 = vmatpush1.msra.mxu0 %v971
    %973 = vmatprep.subr.mxu0 0.0
    %974 = vmatpush1.msra.mxu0 0.0
    %975 = vmatprep.subr.mxu0 0.0
    %976 = vmatpush1.msra.mxu0 0.0
    %977 = vmatprep.subr.mxu0 0.0
    %978 = vmatpush1.msra.mxu0 0.0
    %979 = vmatprep.subr.mxu0 0.0
    %980 = vmatpush1.msra.mxu0 0.0
    %981 = vmatprep.subr.mxu0 0.0
    %982 = vmatpush1.msra.mxu0 0.0
    %983 = vmatprep.subr.mxu0 0.0
    %984 = vmatpush1.msra.mxu0 0.0
    %985 = vmatprep.subr.mxu0 0.0
    %986 = vmatpush1.msra.mxu0 0.0
    %987 = vmatprep.subr.mxu0 0.0
    %988 = vmatpush1.msra.mxu0 0.0
    %989 = vmatprep.subr.mxu0 0.0
    %990 = vmatpush1.msra.mxu0 0.0
    %991 = vmatprep.subr.mxu0 0.0
    %992 = vmatpush1.msra.mxu0 0.0
    %993 = vmatprep.subr.mxu0 0.0
    %994 = vmatpush1.msra.mxu0 0.0
    %995 = vmatprep.subr.mxu0 0.0
    %996 = vmatpush1.msra.mxu0 0.0
    %997 = vmatprep.subr.mxu0 0.0
    %998 = vmatpush1.msra.mxu0 0.0
    %999 = vmatprep.subr.mxu0 0.0
    %1000 = vmatpush1.msra.mxu0 0.0
    %1001 = vmatprep.subr.mxu0 0.0
    %1002 = vmatpush1.msra.mxu0 0.0
    %1003 = vmatprep.subr.mxu0 0.0
    %1004 = vmatpush1.msra.mxu0 0.0
    %1005 = vmatprep.subr.mxu0 0.0
    %1006 = vmatpush1.msra.mxu0 0.0
    %1007 = vmatprep.subr.mxu0 0.0
    %1008 = vmatpush1.msra.mxu0 0.0
    %1009 = vmatprep.subr.mxu0 0.0
    %1010 = vmatpush1.msra.mxu0 0.0
    %1011 = vmatprep.subr.mxu0 0.0
    %1012 = vmatpush1.msra.mxu0 0.0
    %1013 = vmatprep.subr.mxu0 0.0
    %1014 = vmatpush1.msra.mxu0 0.0
    %1015 = vmatprep.subr.mxu0 0.0
    %1016 = vmatpush1.msra.mxu0 0.0
    %1017 = vmatprep.subr.mxu0 0.0
    %1018 = vmatpush1.msra.mxu0 0.0
    %1019 = vmatprep.subr.mxu0 0.0
    %1020 = vmatpush1.msra.mxu0 0.0
    %1021 = vmatprep.subr.mxu0 0.0
    %1022 = vmatpush1.msra.mxu0 0.0
    %1023 = vmatprep.subr.mxu0 0.0
    %1024 = vmatpush1.msra.mxu0 0.0
    %1025 = vmatprep.subr.mxu0 0.0
    %1026 = vmatpush1.msra.mxu0 0.0
    %1027 = vmatprep.subr.mxu0 0.0
    %1028 = vmatpush1.msra.mxu0 0.0
    %1029 = vmatprep.mubr.f32.mxu0 0.0
    %v1030 = vand.u32 %v590, 4294901760
    %1031 = vmatmul.mubr.f32.gmra.mrb[0].mxu0 %v1030
    %v1032 = vpop.f32.mrb[0].mxu0
    %v1033 = vadd.f32 %v942, %v1032
    %v1034 = vpop.f32.mrb[0].mxu0
    %1035 = vmatprep.mubr.f32.mxu0 0.0
    %v1036 = vand.u32 %v593, 4294901760
    %1037 = vmatmul.mubr.f32.gmra.mrb[0].mxu0 %v1036
    %v1038 = vpop.f32.mrb[0].mxu0
    %v1039 = vadd.f32 %v950, %v1038
    %v1040 = vpop.f32.mrb[0].mxu0
    %1041 = vdwg.mxu0
    %1042 = vmatprep.subr.mxu0 0.0
    %v1043 = vand.u32 %v578, 4294901760
    %1044 = vmatpush1.msra.mxu0 %v1043
    %1045 = vmatprep.subr.mxu0 0.0
    %v1046 = vand.u32 %v579, 4294901760
    %1047 = vmatpush1.msra.mxu0 %v1046
    %1048 = vmatprep.subr.mxu0 0.0
    %v1049 = vand.u32 %v580, 4294901760
    %1050 = vmatpush1.msra.mxu0 %v1049
    %1051 = vmatprep.subr.mxu0 0.0
    %v1052 = vand.u32 %v581, 4294901760
    %1053 = vmatpush1.msra.mxu0 %v1052
    %1054 = vmatprep.subr.mxu0 0.0
    %1055 = vmatpush1.msra.mxu0 0.0
    %1056 = vmatprep.subr.mxu0 0.0
    %1057 = vmatpush1.msra.mxu0 0.0
    %1058 = vmatprep.subr.mxu0 0.0
    %1059 = vmatpush1.msra.mxu0 0.0
    %1060 = vmatprep.subr.mxu0 0.0
    %1061 = vmatpush1.msra.mxu0 0.0
    %1062 = vmatprep.subr.mxu0 0.0
    %1063 = vmatpush1.msra.mxu0 0.0
    %1064 = vmatprep.subr.mxu0 0.0
    %1065 = vmatpush1.msra.mxu0 0.0
    %1066 = vmatprep.subr.mxu0 0.0
    %1067 = vmatpush1.msra.mxu0 0.0
    %1068 = vmatprep.subr.mxu0 0.0
    %1069 = vmatpush1.msra.mxu0 0.0
    %1070 = vmatprep.subr.mxu0 0.0
    %1071 = vmatpush1.msra.mxu0 0.0
    %1072 = vmatprep.subr.mxu0 0.0
    %1073 = vmatpush1.msra.mxu0 0.0
    %1074 = vmatprep.subr.mxu0 0.0
    %1075 = vmatpush1.msra.mxu0 0.0
    %1076 = vmatprep.subr.mxu0 0.0
    %1077 = vmatpush1.msra.mxu0 0.0
    %1078 = vmatprep.subr.mxu0 0.0
    %1079 = vmatpush1.msra.mxu0 0.0
    %1080 = vmatprep.subr.mxu0 0.0
    %1081 = vmatpush1.msra.mxu0 0.0
    %1082 = vmatprep.subr.mxu0 0.0
    %1083 = vmatpush1.msra.mxu0 0.0
    %1084 = vmatprep.subr.mxu0 0.0
    %1085 = vmatpush1.msra.mxu0 0.0
    %1086 = vmatprep.subr.mxu0 0.0
    %1087 = vmatpush1.msra.mxu0 0.0
    %1088 = vmatprep.subr.mxu0 0.0
    %1089 = vmatpush1.msra.mxu0 0.0
    %1090 = vmatprep.subr.mxu0 0.0
    %1091 = vmatpush1.msra.mxu0 0.0
    %1092 = vmatprep.subr.mxu0 0.0
    %1093 = vmatpush1.msra.mxu0 0.0
    %1094 = vmatprep.subr.mxu0 0.0
    %1095 = vmatpush1.msra.mxu0 0.0
    %1096 = vmatprep.subr.mxu0 0.0
    %1097 = vmatpush1.msra.mxu0 0.0
    %1098 = vmatprep.subr.mxu0 0.0
    %1099 = vmatpush1.msra.mxu0 0.0
    %1100 = vmatprep.subr.mxu0 0.0
    %1101 = vmatpush1.msra.mxu0 0.0
    %1102 = vmatprep.subr.mxu0 0.0
    %1103 = vmatpush1.msra.mxu0 0.0
    %1104 = vmatprep.subr.mxu0 0.0
    %1105 = vmatpush1.msra.mxu0 0.0
    %1106 = vmatprep.subr.mxu0 0.0
    %1107 = vmatpush1.msra.mxu0 0.0
    %1108 = vmatprep.subr.mxu0 0.0
    %1109 = vmatpush1.msra.mxu0 0.0
    %1110 = vmatprep.mubr.f32.mxu0 0.0
    %v1111 = vand.u32 %v590, 4294901760
    %1112 = vmatmul.mubr.f32.gmra.mrb[0].mxu0 %v1111
    %v1113 = vpop.f32.mrb[0].mxu0
    %v1114 = vadd.f32 %v1033, %v1113
    %v1115 = vpop.f32.mrb[0].mxu0
    %1116 = vmatprep.mubr.f32.mxu0 0.0
    %v1117 = vand.u32 %v593, 4294901760
    %1118 = vmatmul.mubr.f32.gmra.mrb[0].mxu0 %v1117
    %v1119 = vpop.f32.mrb[0].mxu0
    %v1120 = vadd.f32 %v1039, %v1119
    %v1121 = vpop.f32.mrb[0].mxu0
    %1122 = vdwg.mxu0
    %v1123 = vmul.f32 %v1114, 3.0
    %v1124 = vmul.f32 %v1120, 3.0
    %v1125 = vtanh.pop %v1123
    %v1126 = vtanh.pop %v1124
    %v1128 = vsel %vm37, %v574, 0
    %v1131 = vsel %vm37, %v575, 0
    %v1134 = vsel %vm37, %v1125, 0
    %v1137 = vsel %vm37, %v1126, 0
    %1139 = vmatprep.subr.mxu0 0.0
    %v1140 = vand.u32 %v1134, 4294901760
    %1141 = vmatpush1.xpose.msra.mxu0 %v1140
    %1142 = vmatprep.subr.mxu0 0.0
    %v1143 = vand.u32 %v1137, 4294901760
    %1144 = vmatpush1.xpose.msra.mxu0 %v1143
    %1145 = vmatprep.subr.mxu0 0.0
    %1146 = vmatpush1.xpose.msra.mxu0 0.0
    %1147 = vmatprep.subr.mxu0 0.0
    %1148 = vmatpush1.xpose.msra.mxu0 0.0
    %1149 = vmatprep.subr.mxu0 0.0
    %1150 = vmatpush1.xpose.msra.mxu0 0.0
    %1151 = vmatprep.subr.mxu0 0.0
    %1152 = vmatpush1.xpose.msra.mxu0 0.0
    %1153 = vmatprep.subr.mxu0 0.0
    %1154 = vmatpush1.xpose.msra.mxu0 0.0
    %1155 = vmatprep.subr.mxu0 0.0
    %1156 = vmatpush1.xpose.msra.mxu0 0.0
    %1157 = vmatprep.subr.mxu0 0.0
    %1158 = vmatpush1.xpose.msra.mxu0 0.0
    %1159 = vmatprep.subr.mxu0 0.0
    %1160 = vmatpush1.xpose.msra.mxu0 0.0
    %1161 = vmatprep.subr.mxu0 0.0
    %1162 = vmatpush1.xpose.msra.mxu0 0.0
    %1163 = vmatprep.subr.mxu0 0.0
    %1164 = vmatpush1.xpose.msra.mxu0 0.0
    %1165 = vmatprep.subr.mxu0 0.0
    %1166 = vmatpush1.xpose.msra.mxu0 0.0
    %1167 = vmatprep.subr.mxu0 0.0
    %1168 = vmatpush1.xpose.msra.mxu0 0.0
    %1169 = vmatprep.subr.mxu0 0.0
    %1170 = vmatpush1.xpose.msra.mxu0 0.0
    %1171 = vmatprep.subr.mxu0 0.0
    %1172 = vmatpush1.xpose.msra.mxu0 0.0
    %1173 = vmatprep.subr.mxu0 0.0
    %1174 = vmatpush1.xpose.msra.mxu0 0.0
    %1175 = vmatprep.subr.mxu0 0.0
    %1176 = vmatpush1.xpose.msra.mxu0 0.0
    %1177 = vmatprep.subr.mxu0 0.0
    %1178 = vmatpush1.xpose.msra.mxu0 0.0
    %1179 = vmatprep.subr.mxu0 0.0
    %1180 = vmatpush1.xpose.msra.mxu0 0.0
    %1181 = vmatprep.subr.mxu0 0.0
    %1182 = vmatpush1.xpose.msra.mxu0 0.0
    %1183 = vmatprep.subr.mxu0 0.0
    %1184 = vmatpush1.xpose.msra.mxu0 0.0
    %1185 = vmatprep.subr.mxu0 0.0
    %1186 = vmatpush1.xpose.msra.mxu0 0.0
    %1187 = vmatprep.subr.mxu0 0.0
    %1188 = vmatpush1.xpose.msra.mxu0 0.0
    %1189 = vmatprep.subr.mxu0 0.0
    %1190 = vmatpush1.xpose.msra.mxu0 0.0
    %1191 = vmatprep.subr.mxu0 0.0
    %1192 = vmatpush1.xpose.msra.mxu0 0.0
    %1193 = vmatprep.subr.mxu0 0.0
    %1194 = vmatpush1.xpose.msra.mxu0 0.0
    %1195 = vmatprep.subr.mxu0 0.0
    %1196 = vmatpush1.xpose.msra.mxu0 0.0
    %1197 = vmatprep.subr.mxu0 0.0
    %1198 = vmatpush1.xpose.msra.mxu0 0.0
    %1199 = vmatprep.subr.mxu0 0.0
    %1200 = vmatpush1.xpose.msra.mxu0 0.0
    %1201 = vmatprep.subr.mxu0 0.0
    %1202 = vmatpush1.xpose.msra.mxu0 0.0
    %1203 = vmatprep.subr.mxu0 0.0
    %1204 = vmatpush1.xpose.msra.mxu0 0.0
    %1205 = vmatprep.mubr.f32.mxu0 0.0
    %v1206 = vand.u32 %v1128, 4294901760
    %v1207 = vsub.f32 %v1128, %v1206
    %v1208 = vand.u32 %v1207, 4294901760
    %v1209 = vsub.f32 %v1207, %v1208
    %v1210 = vand.u32 %v1209, 4294901760
    %1211 = vmatmul.mubr.f32.gmra.mrb[0].mxu0 %v1210
    %v1212 = vpop.f32.mrb[0].mxu0
    %v1213 = vadd.f32 0.0, %v1212
    %v1214 = vpop.f32.mrb[0].mxu0
    %1215 = vmatprep.mubr.f32.mxu0 0.0
    %v1216 = vand.u32 %v1131, 4294901760
    %v1217 = vsub.f32 %v1131, %v1216
    %v1218 = vand.u32 %v1217, 4294901760
    %v1219 = vsub.f32 %v1217, %v1218
    %v1220 = vand.u32 %v1219, 4294901760
    %1221 = vmatmul.mubr.f32.gmra.mrb[0].mxu0 %v1220
    %v1222 = vpop.f32.mrb[0].mxu0
    %v1223 = vadd.f32 0.0, %v1222
    %v1224 = vpop.f32.mrb[0].mxu0
    %1225 = vdwg.mxu0
    %1226 = vmatprep.subr.mxu0 0.0
    %v1227 = vand.u32 %v1134, 4294901760
    %v1228 = vsub.f32 %v1134, %v1227
    %v1229 = vand.u32 %v1228, 4294901760
    %v1230 = vsub.f32 %v1228, %v1229
    %v1231 = vand.u32 %v1230, 4294901760
    %1232 = vmatpush1.xpose.msra.mxu0 %v1231
    %1233 = vmatprep.subr.mxu0 0.0
    %v1234 = vand.u32 %v1137, 4294901760
    %v1235 = vsub.f32 %v1137, %v1234
    %v1236 = vand.u32 %v1235, 4294901760
    %v1237 = vsub.f32 %v1235, %v1236
    %v1238 = vand.u32 %v1237, 4294901760
    %1239 = vmatpush1.xpose.msra.mxu0 %v1238
    %1240 = vmatprep.subr.mxu0 0.0
    %1241 = vmatpush1.xpose.msra.mxu0 0.0
    %1242 = vmatprep.subr.mxu0 0.0
    %1243 = vmatpush1.xpose.msra.mxu0 0.0
    %1244 = vmatprep.subr.mxu0 0.0
    %1245 = vmatpush1.xpose.msra.mxu0 0.0
    %1246 = vmatprep.subr.mxu0 0.0
    %1247 = vmatpush1.xpose.msra.mxu0 0.0
    %1248 = vmatprep.subr.mxu0 0.0
    %1249 = vmatpush1.xpose.msra.mxu0 0.0
    %1250 = vmatprep.subr.mxu0 0.0
    %1251 = vmatpush1.xpose.msra.mxu0 0.0
    %1252 = vmatprep.subr.mxu0 0.0
    %1253 = vmatpush1.xpose.msra.mxu0 0.0
    %1254 = vmatprep.subr.mxu0 0.0
    %1255 = vmatpush1.xpose.msra.mxu0 0.0
    %1256 = vmatprep.subr.mxu0 0.0
    %1257 = vmatpush1.xpose.msra.mxu0 0.0
    %1258 = vmatprep.subr.mxu0 0.0
    %1259 = vmatpush1.xpose.msra.mxu0 0.0
    %1260 = vmatprep.subr.mxu0 0.0
    %1261 = vmatpush1.xpose.msra.mxu0 0.0
    %1262 = vmatprep.subr.mxu0 0.0
    %1263 = vmatpush1.xpose.msra.mxu0 0.0
    %1264 = vmatprep.subr.mxu0 0.0
    %1265 = vmatpush1.xpose.msra.mxu0 0.0
    %1266 = vmatprep.subr.mxu0 0.0
    %1267 = vmatpush1.xpose.msra.mxu0 0.0
    %1268 = vmatprep.subr.mxu0 0.0
    %1269 = vmatpush1.xpose.msra.mxu0 0.0
    %1270 = vmatprep.subr.mxu0 0.0
    %1271 = vmatpush1.xpose.msra.mxu0 0.0
    %1272 = vmatprep.subr.mxu0 0.0
    %1273 = vmatpush1.xpose.msra.mxu0 0.0
    %1274 = vmatprep.subr.mxu0 0.0
    %1275 = vmatpush1.xpose.msra.mxu0 0.0
    %1276 = vmatprep.subr.mxu0 0.0
    %1277 = vmatpush1.xpose.msra.mxu0 0.0
    %1278 = vmatprep.subr.mxu0 0.0
    %1279 = vmatpush1.xpose.msra.mxu0 0.0
    %1280 = vmatprep.subr.mxu0 0.0
    %1281 = vmatpush1.xpose.msra.mxu0 0.0
    %1282 = vmatprep.subr.mxu0 0.0
    %1283 = vmatpush1.xpose.msra.mxu0 0.0
    %1284 = vmatprep.subr.mxu0 0.0
    %1285 = vmatpush1.xpose.msra.mxu0 0.0
    %1286 = vmatprep.subr.mxu0 0.0
    %1287 = vmatpush1.xpose.msra.mxu0 0.0
    %1288 = vmatprep.subr.mxu0 0.0
    %1289 = vmatpush1.xpose.msra.mxu0 0.0
    %1290 = vmatprep.subr.mxu0 0.0
    %1291 = vmatpush1.xpose.msra.mxu0 0.0
    %1292 = vmatprep.subr.mxu0 0.0
    %1293 = vmatpush1.xpose.msra.mxu0 0.0
    %1294 = vmatprep.subr.mxu0 0.0
    %1295 = vmatpush1.xpose.msra.mxu0 0.0
    %1296 = vmatprep.subr.mxu0 0.0
    %1297 = vmatpush1.xpose.msra.mxu0 0.0
    %1298 = vmatprep.subr.mxu0 0.0
    %1299 = vmatpush1.xpose.msra.mxu0 0.0
    %1300 = vmatprep.mubr.f32.mxu0 0.0
    %v1301 = vand.u32 %v1128, 4294901760
    %1302 = vmatmul.mubr.f32.gmra.mrb[0].mxu0 %v1301
    %v1303 = vpop.f32.mrb[0].mxu0
    %v1304 = vadd.f32 %v1213, %v1303
    %v1305 = vpop.f32.mrb[0].mxu0
    %1306 = vmatprep.mubr.f32.mxu0 0.0
    %v1307 = vand.u32 %v1131, 4294901760
    %1308 = vmatmul.mubr.f32.gmra.mrb[0].mxu0 %v1307
    %v1309 = vpop.f32.mrb[0].mxu0
    %v1310 = vadd.f32 %v1223, %v1309
    %v1311 = vpop.f32.mrb[0].mxu0
    %1312 = vdwg.mxu0
    %1313 = vmatprep.subr.mxu0 0.0
    %v1314 = vand.u32 %v1134, 4294901760
    %v1315 = vsub.f32 %v1134, %v1314
    %1316 = vmatpush1.xpose.msra.mxu0 %v1315
    %1317 = vmatprep.subr.mxu0 0.0
    %v1318 = vand.u32 %v1137, 4294901760
    %v1319 = vsub.f32 %v1137, %v1318
    %1320 = vmatpush1.xpose.msra.mxu0 %v1319
    %1321 = vmatprep.subr.mxu0 0.0
    %1322 = vmatpush1.xpose.msra.mxu0 0.0
    %1323 = vmatprep.subr.mxu0 0.0
    %1324 = vmatpush1.xpose.msra.mxu0 0.0
    %1325 = vmatprep.subr.mxu0 0.0
    %1326 = vmatpush1.xpose.msra.mxu0 0.0
    %1327 = vmatprep.subr.mxu0 0.0
    %1328 = vmatpush1.xpose.msra.mxu0 0.0
    %1329 = vmatprep.subr.mxu0 0.0
    %1330 = vmatpush1.xpose.msra.mxu0 0.0
    %1331 = vmatprep.subr.mxu0 0.0
    %1332 = vmatpush1.xpose.msra.mxu0 0.0
    %1333 = vmatprep.subr.mxu0 0.0
    %1334 = vmatpush1.xpose.msra.mxu0 0.0
    %1335 = vmatprep.subr.mxu0 0.0
    %1336 = vmatpush1.xpose.msra.mxu0 0.0
    %1337 = vmatprep.subr.mxu0 0.0
    %1338 = vmatpush1.xpose.msra.mxu0 0.0
    %1339 = vmatprep.subr.mxu0 0.0
    %1340 = vmatpush1.xpose.msra.mxu0 0.0
    %1341 = vmatprep.subr.mxu0 0.0
    %1342 = vmatpush1.xpose.msra.mxu0 0.0
    %1343 = vmatprep.subr.mxu0 0.0
    %1344 = vmatpush1.xpose.msra.mxu0 0.0
    %1345 = vmatprep.subr.mxu0 0.0
    %1346 = vmatpush1.xpose.msra.mxu0 0.0
    %1347 = vmatprep.subr.mxu0 0.0
    %1348 = vmatpush1.xpose.msra.mxu0 0.0
    %1349 = vmatprep.subr.mxu0 0.0
    %1350 = vmatpush1.xpose.msra.mxu0 0.0
    %1351 = vmatprep.subr.mxu0 0.0
    %1352 = vmatpush1.xpose.msra.mxu0 0.0
    %1353 = vmatprep.subr.mxu0 0.0
    %1354 = vmatpush1.xpose.msra.mxu0 0.0
    %1355 = vmatprep.subr.mxu0 0.0
    %1356 = vmatpush1.xpose.msra.mxu0 0.0
    %1357 = vmatprep.subr.mxu0 0.0
    %1358 = vmatpush1.xpose.msra.mxu0 0.0
    %1359 = vmatprep.subr.mxu0 0.0
    %1360 = vmatpush1.xpose.msra.mxu0 0.0
    %1361 = vmatprep.subr.mxu0 0.0
    %1362 = vmatpush1.xpose.msra.mxu0 0.0
    %1363 = vmatprep.subr.mxu0 0.0
    %1364 = vmatpush1.xpose.msra.mxu0 0.0
    %1365 = vmatprep.subr.mxu0 0.0
    %1366 = vmatpush1.xpose.msra.mxu0 0.0
    %1367 = vmatprep.subr.mxu0 0.0
    %1368 = vmatpush1.xpose.msra.mxu0 0.0
    %1369 = vmatprep.subr.mxu0 0.0
    %1370 = vmatpush1.xpose.msra.mxu0 0.0
    %1371 = vmatprep.subr.mxu0 0.0
    %1372 = vmatpush1.xpose.msra.mxu0 0.0
    %1373 = vmatprep.subr.mxu0 0.0
    %1374 = vmatpush1.xpose.msra.mxu0 0.0
    %1375 = vmatprep.subr.mxu0 0.0
    %1376 = vmatpush1.xpose.msra.mxu0 0.0
    %1377 = vmatprep.subr.mxu0 0.0
    %1378 = vmatpush1.xpose.msra.mxu0 0.0
    %1379 = vmatprep.subr.mxu0 0.0
    %1380 = vmatpush1.xpose.msra.mxu0 0.0
    %1381 = vmatprep.mubr.f32.mxu0 0.0
    %v1382 = vand.u32 %v1128, 4294901760
    %v1383 = vsub.f32 %v1128, %v1382
    %1384 = vmatmul.mubr.f32.gmra.mrb[0].mxu0 %v1383
    %v1385 = vpop.f32.mrb[0].mxu0
    %v1386 = vadd.f32 %v1304, %v1385
    %v1387 = vpop.f32.mrb[0].mxu0
    %1388 = vmatprep.mubr.f32.mxu0 0.0
    %v1389 = vand.u32 %v1131, 4294901760
    %v1390 = vsub.f32 %v1131, %v1389
    %1391 = vmatmul.mubr.f32.gmra.mrb[0].mxu0 %v1390
    %v1392 = vpop.f32.mrb[0].mxu0
    %v1393 = vadd.f32 %v1310, %v1392
    %v1394 = vpop.f32.mrb[0].mxu0
    %1395 = vdwg.mxu0
    %1396 = vmatprep.subr.mxu0 0.0
    %v1397 = vand.u32 %v1134, 4294901760
    %1398 = vmatpush1.xpose.msra.mxu0 %v1397
    %1399 = vmatprep.subr.mxu0 0.0
    %v1400 = vand.u32 %v1137, 4294901760
    %1401 = vmatpush1.xpose.msra.mxu0 %v1400
    %1402 = vmatprep.subr.mxu0 0.0
    %1403 = vmatpush1.xpose.msra.mxu0 0.0
    %1404 = vmatprep.subr.mxu0 0.0
    %1405 = vmatpush1.xpose.msra.mxu0 0.0
    %1406 = vmatprep.subr.mxu0 0.0
    %1407 = vmatpush1.xpose.msra.mxu0 0.0
    %1408 = vmatprep.subr.mxu0 0.0
    %1409 = vmatpush1.xpose.msra.mxu0 0.0
    %1410 = vmatprep.subr.mxu0 0.0
    %1411 = vmatpush1.xpose.msra.mxu0 0.0
    %1412 = vmatprep.subr.mxu0 0.0
    %1413 = vmatpush1.xpose.msra.mxu0 0.0
    %1414 = vmatprep.subr.mxu0 0.0
    %1415 = vmatpush1.xpose.msra.mxu0 0.0
    %1416 = vmatprep.subr.mxu0 0.0
    %1417 = vmatpush1.xpose.msra.mxu0 0.0
    %1418 = vmatprep.subr.mxu0 0.0
    %1419 = vmatpush1.xpose.msra.mxu0 0.0
    %1420 = vmatprep.subr.mxu0 0.0
    %1421 = vmatpush1.xpose.msra.mxu0 0.0
    %1422 = vmatprep.subr.mxu0 0.0
    %1423 = vmatpush1.xpose.msra.mxu0 0.0
    %1424 = vmatprep.subr.mxu0 0.0
    %1425 = vmatpush1.xpose.msra.mxu0 0.0
    %1426 = vmatprep.subr.mxu0 0.0
    %1427 = vmatpush1.xpose.msra.mxu0 0.0
    %1428 = vmatprep.subr.mxu0 0.0
    %1429 = vmatpush1.xpose.msra.mxu0 0.0
    %1430 = vmatprep.subr.mxu0 0.0
    %1431 = vmatpush1.xpose.msra.mxu0 0.0
    %1432 = vmatprep.subr.mxu0 0.0
    %1433 = vmatpush1.xpose.msra.mxu0 0.0
    %1434 = vmatprep.subr.mxu0 0.0
    %1435 = vmatpush1.xpose.msra.mxu0 0.0
    %1436 = vmatprep.subr.mxu0 0.0
    %1437 = vmatpush1.xpose.msra.mxu0 0.0
    %1438 = vmatprep.subr.mxu0 0.0
    %1439 = vmatpush1.xpose.msra.mxu0 0.0
    %1440 = vmatprep.subr.mxu0 0.0
    %1441 = vmatpush1.xpose.msra.mxu0 0.0
    %1442 = vmatprep.subr.mxu0 0.0
    %1443 = vmatpush1.xpose.msra.mxu0 0.0
    %1444 = vmatprep.subr.mxu0 0.0
    %1445 = vmatpush1.xpose.msra.mxu0 0.0
    %1446 = vmatprep.subr.mxu0 0.0
    %1447 = vmatpush1.xpose.msra.mxu0 0.0
    %1448 = vmatprep.subr.mxu0 0.0
    %1449 = vmatpush1.xpose.msra.mxu0 0.0
    %1450 = vmatprep.subr.mxu0 0.0
    %1451 = vmatpush1.xpose.msra.mxu0 0.0
    %1452 = vmatprep.subr.mxu0 0.0
    %1453 = vmatpush1.xpose.msra.mxu0 0.0
    %1454 = vmatprep.subr.mxu0 0.0
    %1455 = vmatpush1.xpose.msra.mxu0 0.0
    %1456 = vmatprep.subr.mxu0 0.0
    %1457 = vmatpush1.xpose.msra.mxu0 0.0
    %1458 = vmatprep.subr.mxu0 0.0
    %1459 = vmatpush1.xpose.msra.mxu0 0.0
    %1460 = vmatprep.subr.mxu0 0.0
    %1461 = vmatpush1.xpose.msra.mxu0 0.0
    %1462 = vmatprep.mubr.f32.mxu0 0.0
    %v1463 = vand.u32 %v1128, 4294901760
    %v1464 = vsub.f32 %v1128, %v1463
    %v1465 = vand.u32 %v1464, 4294901760
    %1466 = vmatmul.mubr.f32.gmra.mrb[0].mxu0 %v1465
    %v1467 = vpop.f32.mrb[0].mxu0
    %v1468 = vadd.f32 %v1386, %v1467
    %v1469 = vpop.f32.mrb[0].mxu0
    %1470 = vmatprep.mubr.f32.mxu0 0.0
    %v1471 = vand.u32 %v1131, 4294901760
    %v1472 = vsub.f32 %v1131, %v1471
    %v1473 = vand.u32 %v1472, 4294901760
    %1474 = vmatmul.mubr.f32.gmra.mrb[0].mxu0 %v1473
    %v1475 = vpop.f32.mrb[0].mxu0
    %v1476 = vadd.f32 %v1393, %v1475
    %v1477 = vpop.f32.mrb[0].mxu0
    %1478 = vdwg.mxu0
    %1479 = vmatprep.subr.mxu0 0.0
    %v1480 = vand.u32 %v1134, 4294901760
    %v1481 = vsub.f32 %v1134, %v1480
    %v1482 = vand.u32 %v1481, 4294901760
    %1483 = vmatpush1.xpose.msra.mxu0 %v1482
    %1484 = vmatprep.subr.mxu0 0.0
    %v1485 = vand.u32 %v1137, 4294901760
    %v1486 = vsub.f32 %v1137, %v1485
    %v1487 = vand.u32 %v1486, 4294901760
    %1488 = vmatpush1.xpose.msra.mxu0 %v1487
    %1489 = vmatprep.subr.mxu0 0.0
    %1490 = vmatpush1.xpose.msra.mxu0 0.0
    %1491 = vmatprep.subr.mxu0 0.0
    %1492 = vmatpush1.xpose.msra.mxu0 0.0
    %1493 = vmatprep.subr.mxu0 0.0
    %1494 = vmatpush1.xpose.msra.mxu0 0.0
    %1495 = vmatprep.subr.mxu0 0.0
    %1496 = vmatpush1.xpose.msra.mxu0 0.0
    %1497 = vmatprep.subr.mxu0 0.0
    %1498 = vmatpush1.xpose.msra.mxu0 0.0
    %1499 = vmatprep.subr.mxu0 0.0
    %1500 = vmatpush1.xpose.msra.mxu0 0.0
    %1501 = vmatprep.subr.mxu0 0.0
    %1502 = vmatpush1.xpose.msra.mxu0 0.0
    %1503 = vmatprep.subr.mxu0 0.0
    %1504 = vmatpush1.xpose.msra.mxu0 0.0
    %1505 = vmatprep.subr.mxu0 0.0
    %1506 = vmatpush1.xpose.msra.mxu0 0.0
    %1507 = vmatprep.subr.mxu0 0.0
    %1508 = vmatpush1.xpose.msra.mxu0 0.0
    %1509 = vmatprep.subr.mxu0 0.0
    %1510 = vmatpush1.xpose.msra.mxu0 0.0
    %1511 = vmatprep.subr.mxu0 0.0
    %1512 = vmatpush1.xpose.msra.mxu0 0.0
    %1513 = vmatprep.subr.mxu0 0.0
    %1514 = vmatpush1.xpose.msra.mxu0 0.0
    %1515 = vmatprep.subr.mxu0 0.0
    %1516 = vmatpush1.xpose.msra.mxu0 0.0
    %1517 = vmatprep.subr.mxu0 0.0
    %1518 = vmatpush1.xpose.msra.mxu0 0.0
    %1519 = vmatprep.subr.mxu0 0.0
    %1520 = vmatpush1.xpose.msra.mxu0 0.0
    %1521 = vmatprep.subr.mxu0 0.0
    %1522 = vmatpush1.xpose.msra.mxu0 0.0
    %1523 = vmatprep.subr.mxu0 0.0
    %1524 = vmatpush1.xpose.msra.mxu0 0.0
    %1525 = vmatprep.subr.mxu0 0.0
    %1526 = vmatpush1.xpose.msra.mxu0 0.0
    %1527 = vmatprep.subr.mxu0 0.0
    %1528 = vmatpush1.xpose.msra.mxu0 0.0
    %1529 = vmatprep.subr.mxu0 0.0
    %1530 = vmatpush1.xpose.msra.mxu0 0.0
    %1531 = vmatprep.subr.mxu0 0.0
    %1532 = vmatpush1.xpose.msra.mxu0 0.0
    %1533 = vmatprep.subr.mxu0 0.0
    %1534 = vmatpush1.xpose.msra.mxu0 0.0
    %1535 = vmatprep.subr.mxu0 0.0
    %1536 = vmatpush1.xpose.msra.mxu0 0.0
    %1537 = vmatprep.subr.mxu0 0.0
    %1538 = vmatpush1.xpose.msra.mxu0 0.0
    %1539 = vmatprep.subr.mxu0 0.0
    %1540 = vmatpush1.xpose.msra.mxu0 0.0
    %1541 = vmatprep.subr.mxu0 0.0
    %1542 = vmatpush1.xpose.msra.mxu0 0.0
    %1543 = vmatprep.subr.mxu0 0.0
    %1544 = vmatpush1.xpose.msra.mxu0 0.0
    %1545 = vmatprep.subr.mxu0 0.0
    %1546 = vmatpush1.xpose.msra.mxu0 0.0
    %1547 = vmatprep.subr.mxu0 0.0
    %1548 = vmatpush1.xpose.msra.mxu0 0.0
    %1549 = vmatprep.mubr.f32.mxu0 0.0
    %v1550 = vand.u32 %v1128, 4294901760
    %1551 = vmatmul.mubr.f32.gmra.mrb[0].mxu0 %v1550
    %v1552 = vpop.f32.mrb[0].mxu0
    %v1553 = vadd.f32 %v1468, %v1552
    %v1554 = vpop.f32.mrb[0].mxu0
    %1555 = vmatprep.mubr.f32.mxu0 0.0
    %v1556 = vand.u32 %v1131, 4294901760
    %1557 = vmatmul.mubr.f32.gmra.mrb[0].mxu0 %v1556
    %v1558 = vpop.f32.mrb[0].mxu0
    %v1559 = vadd.f32 %v1476, %v1558
    %v1560 = vpop.f32.mrb[0].mxu0
    %1561 = vdwg.mxu0
    %1562 = vmatprep.subr.mxu0 0.0
    %v1563 = vand.u32 %v1134, 4294901760
    %1564 = vmatpush1.xpose.msra.mxu0 %v1563
    %1565 = vmatprep.subr.mxu0 0.0
    %v1566 = vand.u32 %v1137, 4294901760
    %1567 = vmatpush1.xpose.msra.mxu0 %v1566
    %1568 = vmatprep.subr.mxu0 0.0
    %1569 = vmatpush1.xpose.msra.mxu0 0.0
    %1570 = vmatprep.subr.mxu0 0.0
    %1571 = vmatpush1.xpose.msra.mxu0 0.0
    %1572 = vmatprep.subr.mxu0 0.0
    %1573 = vmatpush1.xpose.msra.mxu0 0.0
    %1574 = vmatprep.subr.mxu0 0.0
    %1575 = vmatpush1.xpose.msra.mxu0 0.0
    %1576 = vmatprep.subr.mxu0 0.0
    %1577 = vmatpush1.xpose.msra.mxu0 0.0
    %1578 = vmatprep.subr.mxu0 0.0
    %1579 = vmatpush1.xpose.msra.mxu0 0.0
    %1580 = vmatprep.subr.mxu0 0.0
    %1581 = vmatpush1.xpose.msra.mxu0 0.0
    %1582 = vmatprep.subr.mxu0 0.0
    %1583 = vmatpush1.xpose.msra.mxu0 0.0
    %1584 = vmatprep.subr.mxu0 0.0
    %1585 = vmatpush1.xpose.msra.mxu0 0.0
    %1586 = vmatprep.subr.mxu0 0.0
    %1587 = vmatpush1.xpose.msra.mxu0 0.0
    %1588 = vmatprep.subr.mxu0 0.0
    %1589 = vmatpush1.xpose.msra.mxu0 0.0
    %1590 = vmatprep.subr.mxu0 0.0
    %1591 = vmatpush1.xpose.msra.mxu0 0.0
    %1592 = vmatprep.subr.mxu0 0.0
    %1593 = vmatpush1.xpose.msra.mxu0 0.0
    %1594 = vmatprep.subr.mxu0 0.0
    %1595 = vmatpush1.xpose.msra.mxu0 0.0
    %1596 = vmatprep.subr.mxu0 0.0
    %1597 = vmatpush1.xpose.msra.mxu0 0.0
    %1598 = vmatprep.subr.mxu0 0.0
    %1599 = vmatpush1.xpose.msra.mxu0 0.0
    %1600 = vmatprep.subr.mxu0 0.0
    %1601 = vmatpush1.xpose.msra.mxu0 0.0
    %1602 = vmatprep.subr.mxu0 0.0
    %1603 = vmatpush1.xpose.msra.mxu0 0.0
    %1604 = vmatprep.subr.mxu0 0.0
    %1605 = vmatpush1.xpose.msra.mxu0 0.0
    %1606 = vmatprep.subr.mxu0 0.0
    %1607 = vmatpush1.xpose.msra.mxu0 0.0
    %1608 = vmatprep.subr.mxu0 0.0
    %1609 = vmatpush1.xpose.msra.mxu0 0.0
    %1610 = vmatprep.subr.mxu0 0.0
    %1611 = vmatpush1.xpose.msra.mxu0 0.0
    %1612 = vmatprep.subr.mxu0 0.0
    %1613 = vmatpush1.xpose.msra.mxu0 0.0
    %1614 = vmatprep.subr.mxu0 0.0
    %1615 = vmatpush1.xpose.msra.mxu0 0.0
    %1616 = vmatprep.subr.mxu0 0.0
    %1617 = vmatpush1.xpose.msra.mxu0 0.0
    %1618 = vmatprep.subr.mxu0 0.0
    %1619 = vmatpush1.xpose.msra.mxu0 0.0
    %1620 = vmatprep.subr.mxu0 0.0
    %1621 = vmatpush1.xpose.msra.mxu0 0.0
    %1622 = vmatprep.subr.mxu0 0.0
    %1623 = vmatpush1.xpose.msra.mxu0 0.0
    %1624 = vmatprep.subr.mxu0 0.0
    %1625 = vmatpush1.xpose.msra.mxu0 0.0
    %1626 = vmatprep.subr.mxu0 0.0
    %1627 = vmatpush1.xpose.msra.mxu0 0.0
    %1628 = vmatprep.mubr.f32.mxu0 0.0
    %v1629 = vand.u32 %v1128, 4294901760
    %1630 = vmatmul.mubr.f32.gmra.mrb[0].mxu0 %v1629
    %v1631 = vpop.f32.mrb[0].mxu0
    %v1632 = vadd.f32 %v1553, %v1631
    %v1633 = vpop.f32.mrb[0].mxu0
    %1634 = vmatprep.mubr.f32.mxu0 0.0
    %v1635 = vand.u32 %v1131, 4294901760
    %1636 = vmatmul.mubr.f32.gmra.mrb[0].mxu0 %v1635
    %v1637 = vpop.f32.mrb[0].mxu0
    %v1638 = vadd.f32 %v1559, %v1637
    %v1639 = vpop.f32.mrb[0].mxu0
    %1640 = vdwg.mxu0
    %1641 = vmatprep.subr.mxu0 0.0
    %v1642 = vand.u32 %v1128, 4294901760
    %1643 = vmatpush1.xpose.msra.mxu0 %v1642
    %1644 = vmatprep.subr.mxu0 0.0
    %v1645 = vand.u32 %v1131, 4294901760
    %1646 = vmatpush1.xpose.msra.mxu0 %v1645
    %1647 = vmatprep.subr.mxu0 0.0
    %1648 = vmatpush1.xpose.msra.mxu0 0.0
    %1649 = vmatprep.subr.mxu0 0.0
    %1650 = vmatpush1.xpose.msra.mxu0 0.0
    %1651 = vmatprep.subr.mxu0 0.0
    %1652 = vmatpush1.xpose.msra.mxu0 0.0
    %1653 = vmatprep.subr.mxu0 0.0
    %1654 = vmatpush1.xpose.msra.mxu0 0.0
    %1655 = vmatprep.subr.mxu0 0.0
    %1656 = vmatpush1.xpose.msra.mxu0 0.0
    %1657 = vmatprep.subr.mxu0 0.0
    %1658 = vmatpush1.xpose.msra.mxu0 0.0
    %1659 = vmatprep.subr.mxu0 0.0
    %1660 = vmatpush1.xpose.msra.mxu0 0.0
    %1661 = vmatprep.subr.mxu0 0.0
    %1662 = vmatpush1.xpose.msra.mxu0 0.0
    %1663 = vmatprep.subr.mxu0 0.0
    %1664 = vmatpush1.xpose.msra.mxu0 0.0
    %1665 = vmatprep.subr.mxu0 0.0
    %1666 = vmatpush1.xpose.msra.mxu0 0.0
    %1667 = vmatprep.subr.mxu0 0.0
    %1668 = vmatpush1.xpose.msra.mxu0 0.0
    %1669 = vmatprep.subr.mxu0 0.0
    %1670 = vmatpush1.xpose.msra.mxu0 0.0
    %1671 = vmatprep.subr.mxu0 0.0
    %1672 = vmatpush1.xpose.msra.mxu0 0.0
    %1673 = vmatprep.subr.mxu0 0.0
    %1674 = vmatpush1.xpose.msra.mxu0 0.0
    %1675 = vmatprep.subr.mxu0 0.0
    %1676 = vmatpush1.xpose.msra.mxu0 0.0
    %1677 = vmatprep.subr.mxu0 0.0
    %1678 = vmatpush1.xpose.msra.mxu0 0.0
    %1679 = vmatprep.subr.mxu0 0.0
    %1680 = vmatpush1.xpose.msra.mxu0 0.0
    %1681 = vmatprep.subr.mxu0 0.0
    %1682 = vmatpush1.xpose.msra.mxu0 0.0
    %1683 = vmatprep.subr.mxu0 0.0
    %1684 = vmatpush1.xpose.msra.mxu0 0.0
    %1685 = vmatprep.subr.mxu0 0.0
    %1686 = vmatpush1.xpose.msra.mxu0 0.0
    %1687 = vmatprep.subr.mxu0 0.0
    %1688 = vmatpush1.xpose.msra.mxu0 0.0
    %1689 = vmatprep.subr.mxu0 0.0
    %1690 = vmatpush1.xpose.msra.mxu0 0.0
    %1691 = vmatprep.subr.mxu0 0.0
    %1692 = vmatpush1.xpose.msra.mxu0 0.0
    %1693 = vmatprep.subr.mxu0 0.0
    %1694 = vmatpush1.xpose.msra.mxu0 0.0
    %1695 = vmatprep.subr.mxu0 0.0
    %1696 = vmatpush1.xpose.msra.mxu0 0.0
    %1697 = vmatprep.subr.mxu0 0.0
    %1698 = vmatpush1.xpose.msra.mxu0 0.0
    %1699 = vmatprep.subr.mxu0 0.0
    %1700 = vmatpush1.xpose.msra.mxu0 0.0
    %1701 = vmatprep.subr.mxu0 0.0
    %1702 = vmatpush1.xpose.msra.mxu0 0.0
    %1703 = vmatprep.subr.mxu0 0.0
    %1704 = vmatpush1.xpose.msra.mxu0 0.0
    %1705 = vmatprep.subr.mxu0 0.0
    %1706 = vmatpush1.xpose.msra.mxu0 0.0
    %1707 = vmatprep.mubr.f32.mxu0 0.0
    %v1708 = vand.u32 %v1134, 4294901760
    %v1709 = vsub.f32 %v1134, %v1708
    %v1710 = vand.u32 %v1709, 4294901760
    %v1711 = vsub.f32 %v1709, %v1710
    %v1712 = vand.u32 %v1711, 4294901760
    %1713 = vmatmul.mubr.f32.gmra.mrb[0].mxu0 %v1712
    %v1714 = vpop.f32.mrb[0].mxu0
    %v1715 = vadd.f32 0.0, %v1714
    %v1716 = vpop.f32.mrb[0].mxu0
    %1717 = vmatprep.mubr.f32.mxu0 0.0
    %v1718 = vand.u32 %v1137, 4294901760
    %v1719 = vsub.f32 %v1137, %v1718
    %v1720 = vand.u32 %v1719, 4294901760
    %v1721 = vsub.f32 %v1719, %v1720
    %v1722 = vand.u32 %v1721, 4294901760
    %1723 = vmatmul.mubr.f32.gmra.mrb[0].mxu0 %v1722
    %v1724 = vpop.f32.mrb[0].mxu0
    %v1725 = vadd.f32 0.0, %v1724
    %v1726 = vpop.f32.mrb[0].mxu0
    %1727 = vdwg.mxu0
    %1728 = vmatprep.subr.mxu0 0.0
    %v1729 = vand.u32 %v1128, 4294901760
    %v1730 = vsub.f32 %v1128, %v1729
    %v1731 = vand.u32 %v1730, 4294901760
    %v1732 = vsub.f32 %v1730, %v1731
    %v1733 = vand.u32 %v1732, 4294901760
    %1734 = vmatpush1.xpose.msra.mxu0 %v1733
    %1735 = vmatprep.subr.mxu0 0.0
    %v1736 = vand.u32 %v1131, 4294901760
    %v1737 = vsub.f32 %v1131, %v1736
    %v1738 = vand.u32 %v1737, 4294901760
    %v1739 = vsub.f32 %v1737, %v1738
    %v1740 = vand.u32 %v1739, 4294901760
    %1741 = vmatpush1.xpose.msra.mxu0 %v1740
    %1742 = vmatprep.subr.mxu0 0.0
    %1743 = vmatpush1.xpose.msra.mxu0 0.0
    %1744 = vmatprep.subr.mxu0 0.0
    %1745 = vmatpush1.xpose.msra.mxu0 0.0
    %1746 = vmatprep.subr.mxu0 0.0
    %1747 = vmatpush1.xpose.msra.mxu0 0.0
    %1748 = vmatprep.subr.mxu0 0.0
    %1749 = vmatpush1.xpose.msra.mxu0 0.0
    %1750 = vmatprep.subr.mxu0 0.0
    %1751 = vmatpush1.xpose.msra.mxu0 0.0
    %1752 = vmatprep.subr.mxu0 0.0
    %1753 = vmatpush1.xpose.msra.mxu0 0.0
    %1754 = vmatprep.subr.mxu0 0.0
    %1755 = vmatpush1.xpose.msra.mxu0 0.0
    %1756 = vmatprep.subr.mxu0 0.0
    %1757 = vmatpush1.xpose.msra.mxu0 0.0
    %1758 = vmatprep.subr.mxu0 0.0
    %1759 = vmatpush1.xpose.msra.mxu0 0.0
    %1760 = vmatprep.subr.mxu0 0.0
    %1761 = vmatpush1.xpose.msra.mxu0 0.0
    %1762 = vmatprep.subr.mxu0 0.0
    %1763 = vmatpush1.xpose.msra.mxu0 0.0
    %1764 = vmatprep.subr.mxu0 0.0
    %1765 = vmatpush1.xpose.msra.mxu0 0.0
    %1766 = vmatprep.subr.mxu0 0.0
    %1767 = vmatpush1.xpose.msra.mxu0 0.0
    %1768 = vmatprep.subr.mxu0 0.0
    %1769 = vmatpush1.xpose.msra.mxu0 0.0
    %1770 = vmatprep.subr.mxu0 0.0
    %1771 = vmatpush1.xpose.msra.mxu0 0.0
    %1772 = vmatprep.subr.mxu0 0.0
    %1773 = vmatpush1.xpose.msra.mxu0 0.0
    %1774 = vmatprep.subr.mxu0 0.0
    %1775 = vmatpush1.xpose.msra.mxu0 0.0
    %1776 = vmatprep.subr.mxu0 0.0
    %1777 = vmatpush1.xpose.msra.mxu0 0.0
    %1778 = vmatprep.subr.mxu0 0.0
    %1779 = vmatpush1.xpose.msra.mxu0 0.0
    %1780 = vmatprep.subr.mxu0 0.0
    %1781 = vmatpush1.xpose.msra.mxu0 0.0
    %1782 = vmatprep.subr.mxu0 0.0
    %1783 = vmatpush1.xpose.msra.mxu0 0.0
    %1784 = vmatprep.subr.mxu0 0.0
    %1785 = vmatpush1.xpose.msra.mxu0 0.0
    %1786 = vmatprep.subr.mxu0 0.0
    %1787 = vmatpush1.xpose.msra.mxu0 0.0
    %1788 = vmatprep.subr.mxu0 0.0
    %1789 = vmatpush1.xpose.msra.mxu0 0.0
    %1790 = vmatprep.subr.mxu0 0.0
    %1791 = vmatpush1.xpose.msra.mxu0 0.0
    %1792 = vmatprep.subr.mxu0 0.0
    %1793 = vmatpush1.xpose.msra.mxu0 0.0
    %1794 = vmatprep.subr.mxu0 0.0
    %1795 = vmatpush1.xpose.msra.mxu0 0.0
    %1796 = vmatprep.subr.mxu0 0.0
    %1797 = vmatpush1.xpose.msra.mxu0 0.0
    %1798 = vmatprep.subr.mxu0 0.0
    %1799 = vmatpush1.xpose.msra.mxu0 0.0
    %1800 = vmatprep.subr.mxu0 0.0
    %1801 = vmatpush1.xpose.msra.mxu0 0.0
    %1802 = vmatprep.mubr.f32.mxu0 0.0
    %v1803 = vand.u32 %v1134, 4294901760
    %1804 = vmatmul.mubr.f32.gmra.mrb[0].mxu0 %v1803
    %v1805 = vpop.f32.mrb[0].mxu0
    %v1806 = vadd.f32 %v1715, %v1805
    %v1807 = vpop.f32.mrb[0].mxu0
    %1808 = vmatprep.mubr.f32.mxu0 0.0
    %v1809 = vand.u32 %v1137, 4294901760
    %1810 = vmatmul.mubr.f32.gmra.mrb[0].mxu0 %v1809
    %v1811 = vpop.f32.mrb[0].mxu0
    %v1812 = vadd.f32 %v1725, %v1811
    %v1813 = vpop.f32.mrb[0].mxu0
    %1814 = vdwg.mxu0
    %1815 = vmatprep.subr.mxu0 0.0
    %v1816 = vand.u32 %v1128, 4294901760
    %v1817 = vsub.f32 %v1128, %v1816
    %1818 = vmatpush1.xpose.msra.mxu0 %v1817
    %1819 = vmatprep.subr.mxu0 0.0
    %v1820 = vand.u32 %v1131, 4294901760
    %v1821 = vsub.f32 %v1131, %v1820
    %1822 = vmatpush1.xpose.msra.mxu0 %v1821
    %1823 = vmatprep.subr.mxu0 0.0
    %1824 = vmatpush1.xpose.msra.mxu0 0.0
    %1825 = vmatprep.subr.mxu0 0.0
    %1826 = vmatpush1.xpose.msra.mxu0 0.0
    %1827 = vmatprep.subr.mxu0 0.0
    %1828 = vmatpush1.xpose.msra.mxu0 0.0
    %1829 = vmatprep.subr.mxu0 0.0
    %1830 = vmatpush1.xpose.msra.mxu0 0.0
    %1831 = vmatprep.subr.mxu0 0.0
    %1832 = vmatpush1.xpose.msra.mxu0 0.0
    %1833 = vmatprep.subr.mxu0 0.0
    %1834 = vmatpush1.xpose.msra.mxu0 0.0
    %1835 = vmatprep.subr.mxu0 0.0
    %1836 = vmatpush1.xpose.msra.mxu0 0.0
    %1837 = vmatprep.subr.mxu0 0.0
    %1838 = vmatpush1.xpose.msra.mxu0 0.0
    %1839 = vmatprep.subr.mxu0 0.0
    %1840 = vmatpush1.xpose.msra.mxu0 0.0
    %1841 = vmatprep.subr.mxu0 0.0
    %1842 = vmatpush1.xpose.msra.mxu0 0.0
    %1843 = vmatprep.subr.mxu0 0.0
    %1844 = vmatpush1.xpose.msra.mxu0 0.0
    %1845 = vmatprep.subr.mxu0 0.0
    %1846 = vmatpush1.xpose.msra.mxu0 0.0
    %1847 = vmatprep.subr.mxu0 0.0
    %1848 = vmatpush1.xpose.msra.mxu0 0.0
    %1849 = vmatprep.subr.mxu0 0.0
    %1850 = vmatpush1.xpose.msra.mxu0 0.0
    %1851 = vmatprep.subr.mxu0 0.0
    %1852 = vmatpush1.xpose.msra.mxu0 0.0
    %1853 = vmatprep.subr.mxu0 0.0
    %1854 = vmatpush1.xpose.msra.mxu0 0.0
    %1855 = vmatprep.subr.mxu0 0.0
    %1856 = vmatpush1.xpose.msra.mxu0 0.0
    %1857 = vmatprep.subr.mxu0 0.0
    %1858 = vmatpush1.xpose.msra.mxu0 0.0
    %1859 = vmatprep.subr.mxu0 0.0
    %1860 = vmatpush1.xpose.msra.mxu0 0.0
    %1861 = vmatprep.subr.mxu0 0.0
    %1862 = vmatpush1.xpose.msra.mxu0 0.0
    %1863 = vmatprep.subr.mxu0 0.0
    %1864 = vmatpush1.xpose.msra.mxu0 0.0
    %1865 = vmatprep.subr.mxu0 0.0
    %1866 = vmatpush1.xpose.msra.mxu0 0.0
    %1867 = vmatprep.subr.mxu0 0.0
    %1868 = vmatpush1.xpose.msra.mxu0 0.0
    %1869 = vmatprep.subr.mxu0 0.0
    %1870 = vmatpush1.xpose.msra.mxu0 0.0
    %1871 = vmatprep.subr.mxu0 0.0
    %1872 = vmatpush1.xpose.msra.mxu0 0.0
    %1873 = vmatprep.subr.mxu0 0.0
    %1874 = vmatpush1.xpose.msra.mxu0 0.0
    %1875 = vmatprep.subr.mxu0 0.0
    %1876 = vmatpush1.xpose.msra.mxu0 0.0
    %1877 = vmatprep.subr.mxu0 0.0
    %1878 = vmatpush1.xpose.msra.mxu0 0.0
    %1879 = vmatprep.subr.mxu0 0.0
    %1880 = vmatpush1.xpose.msra.mxu0 0.0
    %1881 = vmatprep.subr.mxu0 0.0
    %1882 = vmatpush1.xpose.msra.mxu0 0.0
    %1883 = vmatprep.mubr.f32.mxu0 0.0
    %v1884 = vand.u32 %v1134, 4294901760
    %v1885 = vsub.f32 %v1134, %v1884
    %1886 = vmatmul.mubr.f32.gmra.mrb[0].mxu0 %v1885
    %v1887 = vpop.f32.mrb[0].mxu0
    %v1888 = vadd.f32 %v1806, %v1887
    %v1889 = vpop.f32.mrb[0].mxu0
    %1890 = vmatprep.mubr.f32.mxu0 0.0
    %v1891 = vand.u32 %v1137, 4294901760
    %v1892 = vsub.f32 %v1137, %v1891
    %1893 = vmatmul.mubr.f32.gmra.mrb[0].mxu0 %v1892
    %v1894 = vpop.f32.mrb[0].mxu0
    %v1895 = vadd.f32 %v1812, %v1894
    %v1896 = vpop.f32.mrb[0].mxu0
    %1897 = vdwg.mxu0
    %1898 = vmatprep.subr.mxu0 0.0
    %v1899 = vand.u32 %v1128, 4294901760
    %1900 = vmatpush1.xpose.msra.mxu0 %v1899
    %1901 = vmatprep.subr.mxu0 0.0
    %v1902 = vand.u32 %v1131, 4294901760
    %1903 = vmatpush1.xpose.msra.mxu0 %v1902
    %1904 = vmatprep.subr.mxu0 0.0
    %1905 = vmatpush1.xpose.msra.mxu0 0.0
    %1906 = vmatprep.subr.mxu0 0.0
    %1907 = vmatpush1.xpose.msra.mxu0 0.0
    %1908 = vmatprep.subr.mxu0 0.0
    %1909 = vmatpush1.xpose.msra.mxu0 0.0
    %1910 = vmatprep.subr.mxu0 0.0
    %1911 = vmatpush1.xpose.msra.mxu0 0.0
    %1912 = vmatprep.subr.mxu0 0.0
    %1913 = vmatpush1.xpose.msra.mxu0 0.0
    %1914 = vmatprep.subr.mxu0 0.0
    %1915 = vmatpush1.xpose.msra.mxu0 0.0
    %1916 = vmatprep.subr.mxu0 0.0
    %1917 = vmatpush1.xpose.msra.mxu0 0.0
    %1918 = vmatprep.subr.mxu0 0.0
    %1919 = vmatpush1.xpose.msra.mxu0 0.0
    %1920 = vmatprep.subr.mxu0 0.0
    %1921 = vmatpush1.xpose.msra.mxu0 0.0
    %1922 = vmatprep.subr.mxu0 0.0
    %1923 = vmatpush1.xpose.msra.mxu0 0.0
    %1924 = vmatprep.subr.mxu0 0.0
    %1925 = vmatpush1.xpose.msra.mxu0 0.0
    %1926 = vmatprep.subr.mxu0 0.0
    %1927 = vmatpush1.xpose.msra.mxu0 0.0
    %1928 = vmatprep.subr.mxu0 0.0
    %1929 = vmatpush1.xpose.msra.mxu0 0.0
    %1930 = vmatprep.subr.mxu0 0.0
    %1931 = vmatpush1.xpose.msra.mxu0 0.0
    %1932 = vmatprep.subr.mxu0 0.0
    %1933 = vmatpush1.xpose.msra.mxu0 0.0
    %1934 = vmatprep.subr.mxu0 0.0
    %1935 = vmatpush1.xpose.msra.mxu0 0.0
    %1936 = vmatprep.subr.mxu0 0.0
    %1937 = vmatpush1.xpose.msra.mxu0 0.0
    %1938 = vmatprep.subr.mxu0 0.0
    %1939 = vmatpush1.xpose.msra.mxu0 0.0
    %1940 = vmatprep.subr.mxu0 0.0
    %1941 = vmatpush1.xpose.msra.mxu0 0.0
    %1942 = vmatprep.subr.mxu0 0.0
    %1943 = vmatpush1.xpose.msra.mxu0 0.0
    %1944 = vmatprep.subr.mxu0 0.0
    %1945 = vmatpush1.xpose.msra.mxu0 0.0
    %1946 = vmatprep.subr.mxu0 0.0
    %1947 = vmatpush1.xpose.msra.mxu0 0.0
    %1948 = vmatprep.subr.mxu0 0.0
    %1949 = vmatpush1.xpose.msra.mxu0 0.0
    %1950 = vmatprep.subr.mxu0 0.0
    %1951 = vmatpush1.xpose.msra.mxu0 0.0
    %1952 = vmatprep.subr.mxu0 0.0
    %1953 = vmatpush1.xpose.msra.mxu0 0.0
    %1954 = vmatprep.subr.mxu0 0.0
    %1955 = vmatpush1.xpose.msra.mxu0 0.0
    %1956 = vmatprep.subr.mxu0 0.0
    %1957 = vmatpush1.xpose.msra.mxu0 0.0
    %1958 = vmatprep.subr.mxu0 0.0
    %1959 = vmatpush1.xpose.msra.mxu0 0.0
    %1960 = vmatprep.subr.mxu0 0.0
    %1961 = vmatpush1.xpose.msra.mxu0 0.0
    %1962 = vmatprep.subr.mxu0 0.0
    %1963 = vmatpush1.xpose.msra.mxu0 0.0
    %1964 = vmatprep.mubr.f32.mxu0 0.0
    %v1965 = vand.u32 %v1134, 4294901760
    %v1966 = vsub.f32 %v1134, %v1965
    %v1967 = vand.u32 %v1966, 4294901760
    %1968 = vmatmul.mubr.f32.gmra.mrb[0].mxu0 %v1967
    %v1969 = vpop.f32.mrb[0].mxu0
    %v1970 = vadd.f32 %v1888, %v1969
    %v1971 = vpop.f32.mrb[0].mxu0
    %1972 = vmatprep.mubr.f32.mxu0 0.0
    %v1973 = vand.u32 %v1137, 4294901760
    %v1974 = vsub.f32 %v1137, %v1973
    %v1975 = vand.u32 %v1974, 4294901760
    %1976 = vmatmul.mubr.f32.gmra.mrb[0].mxu0 %v1975
    %v1977 = vpop.f32.mrb[0].mxu0
    %v1978 = vadd.f32 %v1895, %v1977
    %v1979 = vpop.f32.mrb[0].mxu0
    %1980 = vdwg.mxu0
    %1981 = vmatprep.subr.mxu0 0.0
    %v1982 = vand.u32 %v1128, 4294901760
    %v1983 = vsub.f32 %v1128, %v1982
    %v1984 = vand.u32 %v1983, 4294901760
    %1985 = vmatpush1.xpose.msra.mxu0 %v1984
    %1986 = vmatprep.subr.mxu0 0.0
    %v1987 = vand.u32 %v1131, 4294901760
    %v1988 = vsub.f32 %v1131, %v1987
    %v1989 = vand.u32 %v1988, 4294901760
    %1990 = vmatpush1.xpose.msra.mxu0 %v1989
    %1991 = vmatprep.subr.mxu0 0.0
    %1992 = vmatpush1.xpose.msra.mxu0 0.0
    %1993 = vmatprep.subr.mxu0 0.0
    %1994 = vmatpush1.xpose.msra.mxu0 0.0
    %1995 = vmatprep.subr.mxu0 0.0
    %1996 = vmatpush1.xpose.msra.mxu0 0.0
    %1997 = vmatprep.subr.mxu0 0.0
    %1998 = vmatpush1.xpose.msra.mxu0 0.0
    %1999 = vmatprep.subr.mxu0 0.0
    %2000 = vmatpush1.xpose.msra.mxu0 0.0
    %2001 = vmatprep.subr.mxu0 0.0
    %2002 = vmatpush1.xpose.msra.mxu0 0.0
    %2003 = vmatprep.subr.mxu0 0.0
    %2004 = vmatpush1.xpose.msra.mxu0 0.0
    %2005 = vmatprep.subr.mxu0 0.0
    %2006 = vmatpush1.xpose.msra.mxu0 0.0
    %2007 = vmatprep.subr.mxu0 0.0
    %2008 = vmatpush1.xpose.msra.mxu0 0.0
    %2009 = vmatprep.subr.mxu0 0.0
    %2010 = vmatpush1.xpose.msra.mxu0 0.0
    %2011 = vmatprep.subr.mxu0 0.0
    %2012 = vmatpush1.xpose.msra.mxu0 0.0
    %2013 = vmatprep.subr.mxu0 0.0
    %2014 = vmatpush1.xpose.msra.mxu0 0.0
    %2015 = vmatprep.subr.mxu0 0.0
    %2016 = vmatpush1.xpose.msra.mxu0 0.0
    %2017 = vmatprep.subr.mxu0 0.0
    %2018 = vmatpush1.xpose.msra.mxu0 0.0
    %2019 = vmatprep.subr.mxu0 0.0
    %2020 = vmatpush1.xpose.msra.mxu0 0.0
    %2021 = vmatprep.subr.mxu0 0.0
    %2022 = vmatpush1.xpose.msra.mxu0 0.0
    %2023 = vmatprep.subr.mxu0 0.0
    %2024 = vmatpush1.xpose.msra.mxu0 0.0
    %2025 = vmatprep.subr.mxu0 0.0
    %2026 = vmatpush1.xpose.msra.mxu0 0.0
    %2027 = vmatprep.subr.mxu0 0.0
    %2028 = vmatpush1.xpose.msra.mxu0 0.0
    %2029 = vmatprep.subr.mxu0 0.0
    %2030 = vmatpush1.xpose.msra.mxu0 0.0
    %2031 = vmatprep.subr.mxu0 0.0
    %2032 = vmatpush1.xpose.msra.mxu0 0.0
    %2033 = vmatprep.subr.mxu0 0.0
    %2034 = vmatpush1.xpose.msra.mxu0 0.0
    %2035 = vmatprep.subr.mxu0 0.0
    %2036 = vmatpush1.xpose.msra.mxu0 0.0
    %2037 = vmatprep.subr.mxu0 0.0
    %2038 = vmatpush1.xpose.msra.mxu0 0.0
    %2039 = vmatprep.subr.mxu0 0.0
    %2040 = vmatpush1.xpose.msra.mxu0 0.0
    %2041 = vmatprep.subr.mxu0 0.0
    %2042 = vmatpush1.xpose.msra.mxu0 0.0
    %2043 = vmatprep.subr.mxu0 0.0
    %2044 = vmatpush1.xpose.msra.mxu0 0.0
    %2045 = vmatprep.subr.mxu0 0.0
    %2046 = vmatpush1.xpose.msra.mxu0 0.0
    %2047 = vmatprep.subr.mxu0 0.0
    %2048 = vmatpush1.xpose.msra.mxu0 0.0
    %2049 = vmatprep.subr.mxu0 0.0
    %2050 = vmatpush1.xpose.msra.mxu0 0.0
    %2051 = vmatprep.mubr.f32.mxu0 0.0
    %v2052 = vand.u32 %v1134, 4294901760
    %2053 = vmatmul.mubr.f32.gmra.mrb[0].mxu0 %v2052
    %v2054 = vpop.f32.mrb[0].mxu0
    %v2055 = vadd.f32 %v1970, %v2054
    %v2056 = vpop.f32.mrb[0].mxu0
    %2057 = vmatprep.mubr.f32.mxu0 0.0
    %v2058 = vand.u32 %v1137, 4294901760
    %2059 = vmatmul.mubr.f32.gmra.mrb[0].mxu0 %v2058
    %v2060 = vpop.f32.mrb[0].mxu0
    %v2061 = vadd.f32 %v1978, %v2060
    %v2062 = vpop.f32.mrb[0].mxu0
    %2063 = vdwg.mxu0
    %2064 = vmatprep.subr.mxu0 0.0
    %v2065 = vand.u32 %v1128, 4294901760
    %2066 = vmatpush1.xpose.msra.mxu0 %v2065
    %2067 = vmatprep.subr.mxu0 0.0
    %v2068 = vand.u32 %v1131, 4294901760
    %2069 = vmatpush1.xpose.msra.mxu0 %v2068
    %2070 = vmatprep.subr.mxu0 0.0
    %2071 = vmatpush1.xpose.msra.mxu0 0.0
    %2072 = vmatprep.subr.mxu0 0.0
    %2073 = vmatpush1.xpose.msra.mxu0 0.0
    %2074 = vmatprep.subr.mxu0 0.0
    %2075 = vmatpush1.xpose.msra.mxu0 0.0
    %2076 = vmatprep.subr.mxu0 0.0
    %2077 = vmatpush1.xpose.msra.mxu0 0.0
    %2078 = vmatprep.subr.mxu0 0.0
    %2079 = vmatpush1.xpose.msra.mxu0 0.0
    %2080 = vmatprep.subr.mxu0 0.0
    %2081 = vmatpush1.xpose.msra.mxu0 0.0
    %2082 = vmatprep.subr.mxu0 0.0
    %2083 = vmatpush1.xpose.msra.mxu0 0.0
    %2084 = vmatprep.subr.mxu0 0.0
    %2085 = vmatpush1.xpose.msra.mxu0 0.0
    %2086 = vmatprep.subr.mxu0 0.0
    %2087 = vmatpush1.xpose.msra.mxu0 0.0
    %2088 = vmatprep.subr.mxu0 0.0
    %2089 = vmatpush1.xpose.msra.mxu0 0.0
    %2090 = vmatprep.subr.mxu0 0.0
    %2091 = vmatpush1.xpose.msra.mxu0 0.0
    %2092 = vmatprep.subr.mxu0 0.0
    %2093 = vmatpush1.xpose.msra.mxu0 0.0
    %2094 = vmatprep.subr.mxu0 0.0
    %2095 = vmatpush1.xpose.msra.mxu0 0.0
    %2096 = vmatprep.subr.mxu0 0.0
    %2097 = vmatpush1.xpose.msra.mxu0 0.0
    %2098 = vmatprep.subr.mxu0 0.0
    %2099 = vmatpush1.xpose.msra.mxu0 0.0
    %2100 = vmatprep.subr.mxu0 0.0
    %2101 = vmatpush1.xpose.msra.mxu0 0.0
    %2102 = vmatprep.subr.mxu0 0.0
    %2103 = vmatpush1.xpose.msra.mxu0 0.0
    %2104 = vmatprep.subr.mxu0 0.0
    %2105 = vmatpush1.xpose.msra.mxu0 0.0
    %2106 = vmatprep.subr.mxu0 0.0
    %2107 = vmatpush1.xpose.msra.mxu0 0.0
    %2108 = vmatprep.subr.mxu0 0.0
    %2109 = vmatpush1.xpose.msra.mxu0 0.0
    %2110 = vmatprep.subr.mxu0 0.0
    %2111 = vmatpush1.xpose.msra.mxu0 0.0
    %2112 = vmatprep.subr.mxu0 0.0
    %2113 = vmatpush1.xpose.msra.mxu0 0.0
    %2114 = vmatprep.subr.mxu0 0.0
    %2115 = vmatpush1.xpose.msra.mxu0 0.0
    %2116 = vmatprep.subr.mxu0 0.0
    %2117 = vmatpush1.xpose.msra.mxu0 0.0
    %2118 = vmatprep.subr.mxu0 0.0
    %2119 = vmatpush1.xpose.msra.mxu0 0.0
    %2120 = vmatprep.subr.mxu0 0.0
    %2121 = vmatpush1.xpose.msra.mxu0 0.0
    %2122 = vmatprep.subr.mxu0 0.0
    %2123 = vmatpush1.xpose.msra.mxu0 0.0
    %2124 = vmatprep.subr.mxu0 0.0
    %2125 = vmatpush1.xpose.msra.mxu0 0.0
    %2126 = vmatprep.subr.mxu0 0.0
    %2127 = vmatpush1.xpose.msra.mxu0 0.0
    %2128 = vmatprep.subr.mxu0 0.0
    %2129 = vmatpush1.xpose.msra.mxu0 0.0
    %2130 = vmatprep.mubr.f32.mxu0 0.0
    %v2131 = vand.u32 %v1134, 4294901760
    %2132 = vmatmul.mubr.f32.gmra.mrb[0].mxu0 %v2131
    %v2133 = vpop.f32.mrb[0].mxu0
    %v2134 = vadd.f32 %v2055, %v2133
    %v2135 = vpop.f32.mrb[0].mxu0
    %2136 = vmatprep.mubr.f32.mxu0 0.0
    %v2137 = vand.u32 %v1137, 4294901760
    %2138 = vmatmul.mubr.f32.gmra.mrb[0].mxu0 %v2137
    %v2139 = vpop.f32.mrb[0].mxu0
    %v2140 = vadd.f32 %v2061, %v2139
    %v2141 = vpop.f32.mrb[0].mxu0
    %2142 = vdwg.mxu0
    %v2143 = vsub.f32 %v1632, %v2134
    %v2144 = vsub.f32 %v1638, %v2140
    %v2145 = vmul.f32 %v2143, 3.0
    %v2146 = vmul.f32 %v2144, 3.0
    %v2147 = vtanh.pop %v2145
    %v2148 = vtanh.pop %v2146
    %v2149 = vmax.f32 %v2147, 0.0
    %v2150 = vmax.f32 %v2148, 0.0
    %vm2151 = vcmask 130048
    %2152 = vst.msk [vmem:[#allocation2] sm:$0xff] %vm2151, %v2149
    %2153 = vst.msk [vmem:[#allocation2 + $0x8] sm:$0xff] %vm2151, %v2150
    // Predicated region
    $region26: #{mtgnn_graph_learning.1} parent=1 // pred_check
      _
    $region27: #{mtgnn_graph_learning.1} parent=1 // pred_check_branch
      %2155 = sbr.rel (0) target = $region29
    $region28: #{mtgnn_graph_learning.1} parent=1 // pred_region
      %s2157 = ssub.s32 256, 256
      %2158 = vsyncadd [#allocation3], %s2157
      %s2159 = sshll.u32 [#allocation2], 4
      %s2160 = int_to_ptr.vmem [resolvable:$true] %s2159
      %2165 = dma.vmem_to_hbm [thread:$0]  %s2160, 256, %s6, [#allocation3], 128, 128, 8
    $region29: #{mtgnn_graph_learning.1} parent=1 // pred_fallthru
      _
    // Predicated region
    $region30: #{mtgnn_graph_learning.1} parent=1 // pred_check
      _
    $region31: #{mtgnn_graph_learning.1} parent=1 // pred_check_branch
      %2167 = sbr.rel (0) target = $region33
    $region32: #{mtgnn_graph_learning.1} parent=1 // pred_region
      %2168 = dma.done [#allocation3], 256
    $region33: #{mtgnn_graph_learning.1} parent=1 // pred_fallthru
      _
    %2169 = vsyncpa [#allocation3], 1

</llo_original>
